<compile_context>
chip_gen: v7x
topology: tpu7x:2x2x1
jax: 0.10.0
libtpu: 0.0.40
codegen_flags: <defaults>
</compile_context>

<pallas_src>
import functools

import jax
import jax.numpy as jnp
from jax.experimental import pallas as pl
from jax.experimental.pallas import tpu as pltpu

P_DROP = 0.7
HIDDEN = 768
LAYER_IN_DIMS = (768, 96, 48, 24, 12)
S_OUT_DIMS = (96, 48, 24, 12, 2)
E_OUT_DIMS = (96, 48, 24, 12, 8)
OUT_PAD = 128                      # lane-dense padded width of the s output layer
MATMUL_DTYPE = jnp.bfloat16        # MXU operand dtype (accumulation stays f32)


def net_kernel(e_in_ref, s_in_ref,
               ew1, ew2, ew3, ew4, ew5,
               sw1, sw2, sw3, sw4, sw5,
               em1, em2, em3, em4, em5,
               sm1, sm2, sm3, sm4, sm5,
               cw_ref, out_ref, *, batch):
    """Single invocation: two batched 5-layer MLP chains + cross_mul + cross_third."""

    def chain(x, ws, ms):
        # relu -> dropout(mask) -> Linear, repeated, then the output Linear.
        h = jnp.maximum(x, 0.0) * ms[0][...]
        for w, m in zip(ws[:-1], ms[1:]):
            wv = w[...]
            h = jnp.dot(h.astype(wv.dtype), wv, preferred_element_type=jnp.float32)
            h = jnp.maximum(h, 0.0) * m[...]
        wv = ws[-1][...]
        return jnp.dot(h.astype(wv.dtype), wv, preferred_element_type=jnp.float32)

    # (2B, 8): rows [0:B] = pair_e branch, rows [B:2B] = seq_e branch.
    e_out = chain(e_in_ref[...], (ew1, ew2, ew3, ew4, ew5),
                  (em1, em2, em3, em4, em5))
    # (2B, 128): lane-padded s output (only the first 2 lanes are non-zero).
    s_out = chain(s_in_ref[...], (sw1, sw2, sw3, sw4, sw5),
                  (sm1, sm2, sm3, sm4, sm5))

    # cross_mul: z[k, h] = s_out[k, h] * sum_j e_out[k, j]
    e_sum = jnp.sum(e_out, axis=-1, keepdims=True)            # (2B, 1)
    # cross_weight already folded into the per-row scale vector cw_ref (2B, 1).
    cross = s_out * (e_sum * cw_ref[...])                     # (2B, 128)
    # cross_third: weight[0] * pair_cross + weight[1] * seq_cross
    out_ref[...] = cross[:batch, :] + cross[batch:, :]        # (B, 128)


def init_params(key):
    """Deterministic params: Linear weights ~ U(-1/sqrt(fan_in), 1/sqrt(fan_in)),
    stored transposed as (in_features, out_features); bias=False per the spec."""
    params = {}
    keys = jax.random.split(key, 10)
    ki = 0
    for name, outs in (("s", S_OUT_DIMS), ("e", E_OUT_DIMS)):
        for li, (fin, fout) in enumerate(zip(LAYER_IN_DIMS, outs)):
            bound = 1.0 / (fin ** 0.5)
            params[f"{name}_w{li + 1}"] = jax.random.uniform(
                keys[ki], (fin, fout), jnp.float32, -bound, bound)
            ki += 1
    params["s_seq_rand"] = jnp.array([0.25, 0.25, 0.25, 0.25], jnp.float32)
    params["s_pair_rand"] = jnp.array([0.5, 0.5], jnp.float32)
    params["e_seq_rand"] = jnp.array([0.25, 0.25, 0.25, 0.25], jnp.float32)
    params["e_pair_rand"] = jnp.array([0.5, 0.5], jnp.float32)
    params["cross_weight"] = jnp.array([0.5, 0.5], jnp.float32)
    return params


@jax.jit
def net_forward(result, params, dropout_key):
    B = result.shape[0]
    f32 = jnp.float32

    r0 = result[:, 0, :]
    r1 = result[:, 1, :]
    r2 = result[:, 2, :]
    r3 = result[:, 3, :]

    e_pair = params["e_pair_rand"]
    s_pair = params["s_pair_rand"]
    e_seq = params["e_seq_rand"]
    s_seq = params["s_seq_rand"]
    cw = params["cross_weight"]

    # Soft-attention combines (pair_soft_attention / seq_soft_attention).
    pair_e = r0 * e_pair[0] + r2 * e_pair[1]
    seq_e = r0 * e_seq[0] + r1 * e_seq[1] + r2 * e_seq[2] + r3 * e_seq[3]
    pair_s = r0 * s_pair[0] + r2 * s_pair[1]
    seq_s = r0 * s_seq[0] + r1 * s_seq[1] + r2 * s_seq[2] + r3 * s_seq[3]

    e_in = jnp.concatenate([pair_e, seq_e], axis=0).astype(f32)   # (2B, 768)
    s_in = jnp.concatenate([pair_s, seq_s], axis=0).astype(f32)   # (2B, 768)

    # Pre-scaled dropout masks in {0, 1/(1-p)}  (F.dropout p=0.7, training=True).
    keep = 1.0 - P_DROP
    keys = jax.random.split(dropout_key, 2 * len(LAYER_IN_DIMS))
    e_masks, s_masks = [], []
    for i, d in enumerate(LAYER_IN_DIMS):
        e_masks.append(jax.random.bernoulli(
            keys[2 * i], keep, (2 * B, d)).astype(f32) * (1.0 / keep))
        s_masks.append(jax.random.bernoulli(
            keys[2 * i + 1], keep, (2 * B, d)).astype(f32) * (1.0 / keep))

    # bf16 weights (half the weight DMA, bf16 MXU); lane-pad the s output layer.
    e_ws = [params[f"e_w{i + 1}"].astype(MATMUL_DTYPE) for i in range(5)]
    s_ws = [params[f"s_w{i + 1}"].astype(MATMUL_DTYPE) for i in range(5)]
    s_ws[-1] = jnp.pad(s_ws[-1], ((0, 0), (0, OUT_PAD - S_OUT_DIMS[-1])))

    # Per-row cross_third weight: rows [0:B] -> cw[0] (pair), [B:2B] -> cw[1] (seq).
    cw_vec = jnp.concatenate(
        [jnp.full((B, 1), cw[0], f32), jnp.full((B, 1), cw[1], f32)], axis=0)

    operands = [e_in, s_in, *e_ws, *s_ws, *e_masks, *s_masks, cw_vec]

    flops = int(sum(2 * 2 * B * w.shape[0] * w.shape[1] for w in e_ws + s_ws))
    bytes_accessed = int(sum(x.size * x.dtype.itemsize for x in operands)
                         + B * OUT_PAD * 4)

    vmem = pl.BlockSpec(memory_space=pltpu.MemorySpace.VMEM)
    out_padded = pl.pallas_call(
        functools.partial(net_kernel, batch=B),
        out_shape=jax.ShapeDtypeStruct((B, OUT_PAD), jnp.float32),
        in_specs=[vmem] * len(operands),
        out_specs=vmem,
        cost_estimate=pl.CostEstimate(
            flops=flops, transcendentals=0, bytes_accessed=bytes_accessed),
    )(*operands)

    return out_padded[:, :S_OUT_DIMS[-1]]   # (B, 2)


if __name__ == "__main__":
    key = jax.random.PRNGKey(0)
    k_params, k_input, k_drop = jax.random.split(key, 3)

    B = 8  # batch; input is (B, 4, 768) as implied by the soft-attention slicing
    params = init_params(k_params)
    result = jax.random.normal(k_input, (B, 4, HIDDEN), jnp.float32)

    out = net_forward(result, params, k_drop)
    out = jax.block_until_ready(out)

    assert out.shape == (B, 2), out.shape
    assert bool(jnp.all(jnp.isfinite(out)))
    print("KERNEL_OK")
</pallas_src>

<mosaic_0001>
module attributes {stable_mosaic.version = 11 : i64} {
  func.func @net_kernel(%arg0: memref<16x768xf32, #tpu.memory_space<vmem>>, %arg1: memref<16x768xf32, #tpu.memory_space<vmem>>, %arg2: memref<768x96xbf16, #tpu.memory_space<vmem>>, %arg3: memref<96x48xbf16, #tpu.memory_space<vmem>>, %arg4: memref<48x24xbf16, #tpu.memory_space<vmem>>, %arg5: memref<24x12xbf16, #tpu.memory_space<vmem>>, %arg6: memref<12x8xbf16, #tpu.memory_space<vmem>>, %arg7: memref<768x96xbf16, #tpu.memory_space<vmem>>, %arg8: memref<96x48xbf16, #tpu.memory_space<vmem>>, %arg9: memref<48x24xbf16, #tpu.memory_space<vmem>>, %arg10: memref<24x12xbf16, #tpu.memory_space<vmem>>, %arg11: memref<12x128xbf16, #tpu.memory_space<vmem>>, %arg12: memref<16x768xf32, #tpu.memory_space<vmem>>, %arg13: memref<16x96xf32, #tpu.memory_space<vmem>>, %arg14: memref<16x48xf32, #tpu.memory_space<vmem>>, %arg15: memref<16x24xf32, #tpu.memory_space<vmem>>, %arg16: memref<16x12xf32, #tpu.memory_space<vmem>>, %arg17: memref<16x768xf32, #tpu.memory_space<vmem>>, %arg18: memref<16x96xf32, #tpu.memory_space<vmem>>, %arg19: memref<16x48xf32, #tpu.memory_space<vmem>>, %arg20: memref<16x24xf32, #tpu.memory_space<vmem>>, %arg21: memref<16x12xf32, #tpu.memory_space<vmem>>, %arg22: memref<16x1xf32, #tpu.memory_space<vmem>>, %arg23: memref<8x128xf32, #tpu.memory_space<vmem>>) attributes {dimension_semantics = [], scalar_prefetch = 0 : i64, scratch_operands = 0 : i64, tpu.core_type = #tpu.core_type<tc>} {
    %c0 = arith.constant 0 : index
    %c0_0 = arith.constant 0 : index
    %0 = vector.load %arg0[%c0, %c0_0] : memref<16x768xf32, #tpu.memory_space<vmem>>, vector<16x768xf32>
    %cst = arith.constant 0.000000e+00 : f32
    %1 = vector.broadcast %cst : f32 to vector<16x768xf32>
    %2 = arith.maximumf %0, %1 : vector<16x768xf32>
    %c0_1 = arith.constant 0 : index
    %c0_2 = arith.constant 0 : index
    %3 = vector.load %arg12[%c0_1, %c0_2] : memref<16x768xf32, #tpu.memory_space<vmem>>, vector<16x768xf32>
    %4 = arith.mulf %2, %3 : vector<16x768xf32>
    %c0_3 = arith.constant 0 : index
    %c0_4 = arith.constant 0 : index
    %5 = vector.load %arg2[%c0_3, %c0_4] : memref<768x96xbf16, #tpu.memory_space<vmem>>, vector<768x96xbf16>
    %6 = arith.truncf %4 : vector<16x768xf32> to vector<16x768xbf16>
    %cst_5 = arith.constant dense<0.000000e+00> : vector<16x96xf32>
    %7 = tpu.matmul %6, %5, %cst_5 {dimension_numbers = #tpu.dot_dimension_numbers<[1], [0], [0], [1], [0, 0, 1, 1], [], []>} : vector<16x768xbf16>, vector<768x96xbf16>, vector<16x96xf32> -> vector<16x96xf32>
    %cst_6 = arith.constant 0.000000e+00 : f32
    %8 = vector.broadcast %cst_6 : f32 to vector<16x96xf32>
    %9 = arith.maximumf %7, %8 : vector<16x96xf32>
    %c0_7 = arith.constant 0 : index
    %c0_8 = arith.constant 0 : index
    %10 = vector.load %arg13[%c0_7, %c0_8] : memref<16x96xf32, #tpu.memory_space<vmem>>, vector<16x96xf32>
    %11 = arith.mulf %9, %10 : vector<16x96xf32>
    %c0_9 = arith.constant 0 : index
    %c0_10 = arith.constant 0 : index
    %12 = vector.load %arg3[%c0_9, %c0_10] : memref<96x48xbf16, #tpu.memory_space<vmem>>, vector<96x48xbf16>
    %13 = arith.truncf %11 : vector<16x96xf32> to vector<16x96xbf16>
    %cst_11 = arith.constant dense<0.000000e+00> : vector<16x48xf32>
    %14 = tpu.matmul %13, %12, %cst_11 {dimension_numbers = #tpu.dot_dimension_numbers<[1], [0], [0], [1], [0, 0, 1, 1], [], []>} : vector<16x96xbf16>, vector<96x48xbf16>, vector<16x48xf32> -> vector<16x48xf32>
    %cst_12 = arith.constant 0.000000e+00 : f32
    %15 = vector.broadcast %cst_12 : f32 to vector<16x48xf32>
    %16 = arith.maximumf %14, %15 : vector<16x48xf32>
    %c0_13 = arith.constant 0 : index
    %c0_14 = arith.constant 0 : index
    %17 = vector.load %arg14[%c0_13, %c0_14] : memref<16x48xf32, #tpu.memory_space<vmem>>, vector<16x48xf32>
    %18 = arith.mulf %16, %17 : vector<16x48xf32>
    %c0_15 = arith.constant 0 : index
    %c0_16 = arith.constant 0 : index
    %19 = vector.load %arg4[%c0_15, %c0_16] : memref<48x24xbf16, #tpu.memory_space<vmem>>, vector<48x24xbf16>
    %20 = arith.truncf %18 : vector<16x48xf32> to vector<16x48xbf16>
    %cst_17 = arith.constant dense<0.000000e+00> : vector<16x24xf32>
    %21 = tpu.matmul %20, %19, %cst_17 {dimension_numbers = #tpu.dot_dimension_numbers<[1], [0], [0], [1], [0, 0, 1, 1], [], []>} : vector<16x48xbf16>, vector<48x24xbf16>, vector<16x24xf32> -> vector<16x24xf32>
    %cst_18 = arith.constant 0.000000e+00 : f32
    %22 = vector.broadcast %cst_18 : f32 to vector<16x24xf32>
    %23 = arith.maximumf %21, %22 : vector<16x24xf32>
    %c0_19 = arith.constant 0 : index
    %c0_20 = arith.constant 0 : index
    %24 = vector.load %arg15[%c0_19, %c0_20] : memref<16x24xf32, #tpu.memory_space<vmem>>, vector<16x24xf32>
    %25 = arith.mulf %23, %24 : vector<16x24xf32>
    %c0_21 = arith.constant 0 : index
    %c0_22 = arith.constant 0 : index
    %26 = vector.load %arg5[%c0_21, %c0_22] : memref<24x12xbf16, #tpu.memory_space<vmem>>, vector<24x12xbf16>
    %27 = arith.truncf %25 : vector<16x24xf32> to vector<16x24xbf16>
    %cst_23 = arith.constant dense<0.000000e+00> : vector<16x12xf32>
    %28 = tpu.matmul %27, %26, %cst_23 {dimension_numbers = #tpu.dot_dimension_numbers<[1], [0], [0], [1], [0, 0, 1, 1], [], []>} : vector<16x24xbf16>, vector<24x12xbf16>, vector<16x12xf32> -> vector<16x12xf32>
    %cst_24 = arith.constant 0.000000e+00 : f32
    %29 = vector.broadcast %cst_24 : f32 to vector<16x12xf32>
    %30 = arith.maximumf %28, %29 : vector<16x12xf32>
    %c0_25 = arith.constant 0 : index
    %c0_26 = arith.constant 0 : index
    %31 = vector.load %arg16[%c0_25, %c0_26] : memref<16x12xf32, #tpu.memory_space<vmem>>, vector<16x12xf32>
    %32 = arith.mulf %30, %31 : vector<16x12xf32>
    %c0_27 = arith.constant 0 : index
    %c0_28 = arith.constant 0 : index
    %33 = vector.load %arg6[%c0_27, %c0_28] : memref<12x8xbf16, #tpu.memory_space<vmem>>, vector<12x8xbf16>
    %34 = arith.truncf %32 : vector<16x12xf32> to vector<16x12xbf16>
    %cst_29 = arith.constant dense<0.000000e+00> : vector<16x8xf32>
    %35 = tpu.matmul %34, %33, %cst_29 {dimension_numbers = #tpu.dot_dimension_numbers<[1], [0], [0], [1], [0, 0, 1, 1], [], []>} : vector<16x12xbf16>, vector<12x8xbf16>, vector<16x8xf32> -> vector<16x8xf32>
    %c0_30 = arith.constant 0 : index
    %c0_31 = arith.constant 0 : index
    %36 = vector.load %arg1[%c0_30, %c0_31] : memref<16x768xf32, #tpu.memory_space<vmem>>, vector<16x768xf32>
    %cst_32 = arith.constant 0.000000e+00 : f32
    %37 = vector.broadcast %cst_32 : f32 to vector<16x768xf32>
    %38 = arith.maximumf %36, %37 : vector<16x768xf32>
    %c0_33 = arith.constant 0 : index
    %c0_34 = arith.constant 0 : index
    %39 = vector.load %arg17[%c0_33, %c0_34] : memref<16x768xf32, #tpu.memory_space<vmem>>, vector<16x768xf32>
    %40 = arith.mulf %38, %39 : vector<16x768xf32>
    %c0_35 = arith.constant 0 : index
    %c0_36 = arith.constant 0 : index
    %41 = vector.load %arg7[%c0_35, %c0_36] : memref<768x96xbf16, #tpu.memory_space<vmem>>, vector<768x96xbf16>
    %42 = arith.truncf %40 : vector<16x768xf32> to vector<16x768xbf16>
    %cst_37 = arith.constant dense<0.000000e+00> : vector<16x96xf32>
    %43 = tpu.matmul %42, %41, %cst_37 {dimension_numbers = #tpu.dot_dimension_numbers<[1], [0], [0], [1], [0, 0, 1, 1], [], []>} : vector<16x768xbf16>, vector<768x96xbf16>, vector<16x96xf32> -> vector<16x96xf32>
    %cst_38 = arith.constant 0.000000e+00 : f32
    %44 = vector.broadcast %cst_38 : f32 to vector<16x96xf32>
    %45 = arith.maximumf %43, %44 : vector<16x96xf32>
    %c0_39 = arith.constant 0 : index
    %c0_40 = arith.constant 0 : index
    %46 = vector.load %arg18[%c0_39, %c0_40] : memref<16x96xf32, #tpu.memory_space<vmem>>, vector<16x96xf32>
    %47 = arith.mulf %45, %46 : vector<16x96xf32>
    %c0_41 = arith.constant 0 : index
    %c0_42 = arith.constant 0 : index
    %48 = vector.load %arg8[%c0_41, %c0_42] : memref<96x48xbf16, #tpu.memory_space<vmem>>, vector<96x48xbf16>
    %49 = arith.truncf %47 : vector<16x96xf32> to vector<16x96xbf16>
    %cst_43 = arith.constant dense<0.000000e+00> : vector<16x48xf32>
    %50 = tpu.matmul %49, %48, %cst_43 {dimension_numbers = #tpu.dot_dimension_numbers<[1], [0], [0], [1], [0, 0, 1, 1], [], []>} : vector<16x96xbf16>, vector<96x48xbf16>, vector<16x48xf32> -> vector<16x48xf32>
    %cst_44 = arith.constant 0.000000e+00 : f32
    %51 = vector.broadcast %cst_44 : f32 to vector<16x48xf32>
    %52 = arith.maximumf %50, %51 : vector<16x48xf32>
    %c0_45 = arith.constant 0 : index
    %c0_46 = arith.constant 0 : index
    %53 = vector.load %arg19[%c0_45, %c0_46] : memref<16x48xf32, #tpu.memory_space<vmem>>, vector<16x48xf32>
    %54 = arith.mulf %52, %53 : vector<16x48xf32>
    %c0_47 = arith.constant 0 : index
    %c0_48 = arith.constant 0 : index
    %55 = vector.load %arg9[%c0_47, %c0_48] : memref<48x24xbf16, #tpu.memory_space<vmem>>, vector<48x24xbf16>
    %56 = arith.truncf %54 : vector<16x48xf32> to vector<16x48xbf16>
    %cst_49 = arith.constant dense<0.000000e+00> : vector<16x24xf32>
    %57 = tpu.matmul %56, %55, %cst_49 {dimension_numbers = #tpu.dot_dimension_numbers<[1], [0], [0], [1], [0, 0, 1, 1], [], []>} : vector<16x48xbf16>, vector<48x24xbf16>, vector<16x24xf32> -> vector<16x24xf32>
    %cst_50 = arith.constant 0.000000e+00 : f32
    %58 = vector.broadcast %cst_50 : f32 to vector<16x24xf32>
    %59 = arith.maximumf %57, %58 : vector<16x24xf32>
    %c0_51 = arith.constant 0 : index
    %c0_52 = arith.constant 0 : index
    %60 = vector.load %arg20[%c0_51, %c0_52] : memref<16x24xf32, #tpu.memory_space<vmem>>, vector<16x24xf32>
    %61 = arith.mulf %59, %60 : vector<16x24xf32>
    %c0_53 = arith.constant 0 : index
    %c0_54 = arith.constant 0 : index
    %62 = vector.load %arg10[%c0_53, %c0_54] : memref<24x12xbf16, #tpu.memory_space<vmem>>, vector<24x12xbf16>
    %63 = arith.truncf %61 : vector<16x24xf32> to vector<16x24xbf16>
    %cst_55 = arith.constant dense<0.000000e+00> : vector<16x12xf32>
    %64 = tpu.matmul %63, %62, %cst_55 {dimension_numbers = #tpu.dot_dimension_numbers<[1], [0], [0], [1], [0, 0, 1, 1], [], []>} : vector<16x24xbf16>, vector<24x12xbf16>, vector<16x12xf32> -> vector<16x12xf32>
    %cst_56 = arith.constant 0.000000e+00 : f32
    %65 = vector.broadcast %cst_56 : f32 to vector<16x12xf32>
    %66 = arith.maximumf %64, %65 : vector<16x12xf32>
    %c0_57 = arith.constant 0 : index
    %c0_58 = arith.constant 0 : index
    %67 = vector.load %arg21[%c0_57, %c0_58] : memref<16x12xf32, #tpu.memory_space<vmem>>, vector<16x12xf32>
    %68 = arith.mulf %66, %67 : vector<16x12xf32>
    %c0_59 = arith.constant 0 : index
    %c0_60 = arith.constant 0 : index
    %69 = vector.load %arg11[%c0_59, %c0_60] : memref<12x128xbf16, #tpu.memory_space<vmem>>, vector<12x128xbf16>
    %70 = arith.truncf %68 : vector<16x12xf32> to vector<16x12xbf16>
    %cst_61 = arith.constant dense<0.000000e+00> : vector<16x128xf32>
    %71 = tpu.matmul %70, %69, %cst_61 {dimension_numbers = #tpu.dot_dimension_numbers<[1], [0], [0], [1], [0, 0, 1, 1], [], []>} : vector<16x12xbf16>, vector<12x128xbf16>, vector<16x128xf32> -> vector<16x128xf32>
    %cst_62 = arith.constant dense<0.000000e+00> : vector<16xf32>
    %72 = vector.multi_reduction <add>, %35, %cst_62 [1] : vector<16x8xf32> to vector<16xf32>
    %73 = vector.shape_cast %72 : vector<16xf32> to vector<16x1xf32>
    %c0_63 = arith.constant 0 : index
    %c0_64 = arith.constant 0 : index
    %74 = vector.load %arg22[%c0_63, %c0_64] : memref<16x1xf32, #tpu.memory_space<vmem>>, vector<16x1xf32>
    %75 = arith.mulf %73, %74 : vector<16x1xf32>
    %76 = vector.broadcast %75 : vector<16x1xf32> to vector<16x128xf32>
    %77 = arith.mulf %71, %76 : vector<16x128xf32>
    %78 = vector.extract_strided_slice %77 {offsets = [0, 0], sizes = [8, 128], strides = [1, 1]} : vector<16x128xf32> to vector<8x128xf32>
    %79 = vector.extract_strided_slice %77 {offsets = [8, 0], sizes = [8, 128], strides = [1, 1]} : vector<16x128xf32> to vector<8x128xf32>
    %80 = arith.addf %78, %79 : vector<8x128xf32>
    %c0_65 = arith.constant 0 : index
    %c0_66 = arith.constant 0 : index
    %81 = vector.load %arg23[%c0_65, %c0_66] : memref<8x128xf32, #tpu.memory_space<vmem>>, vector<8x128xf32>
    tpu.vector_store %arg23[%c0_65, %c0_66], %80 {strides = array<i32>} : memref<8x128xf32, #tpu.memory_space<vmem>>, vector<8x128xf32>,
    return
  }
}

</mosaic_0001>

<llo_original>
// kernel: net_forward.3
$region0: #{net_forward.3}
  #allocation0 [shape = 'u32[]', space=smem, size = 0x4, offset = 0x4, fixed_abs, tag = 'smem constant byte address 0x4 - core index']
  #allocation1 [shape = 'u32[144,128]{1,0:T(1,128)}', space=vmem, size = 0x12000, scoped, tag = 'internal scratch']
  %s0 = inlined_call_operand.vmem [shape: f32[16,768], index: 0, kind: input, shape index: {}]
  %s1 = inlined_call_operand.vmem [shape: f32[16,768], index: 1, kind: input, shape index: {}]
  %s2 = inlined_call_operand.vmem [shape: bf16[768,96], index: 2, kind: input, shape index: {}]
  %s3 = inlined_call_operand.vmem [shape: bf16[96,48], index: 3, kind: input, shape index: {}]
  %s4 = inlined_call_operand.vmem [shape: bf16[48,24], index: 4, kind: input, shape index: {}]
  %s5 = inlined_call_operand.vmem [shape: bf16[24,12], index: 5, kind: input, shape index: {}]
  %s6 = inlined_call_operand.vmem [shape: bf16[12,8], index: 6, kind: input, shape index: {}]
  %s7 = inlined_call_operand.vmem [shape: bf16[768,96], index: 7, kind: input, shape index: {}]
  %s8 = inlined_call_operand.vmem [shape: bf16[96,48], index: 8, kind: input, shape index: {}]
  %s9 = inlined_call_operand.vmem [shape: bf16[48,24], index: 9, kind: input, shape index: {}]
  %s10 = inlined_call_operand.vmem [shape: bf16[24,12], index: 10, kind: input, shape index: {}]
  %s11 = inlined_call_operand.vmem [shape: bf16[12,128], index: 11, kind: input, shape index: {}]
  %s12 = inlined_call_operand.vmem [shape: f32[16,768], index: 12, kind: input, shape index: {}]
  %s13 = inlined_call_operand.vmem [shape: f32[16,96], index: 13, kind: input, shape index: {}]
  %s14 = inlined_call_operand.vmem [shape: f32[16,48], index: 14, kind: input, shape index: {}]
  %s15 = inlined_call_operand.vmem [shape: f32[16,24], index: 15, kind: input, shape index: {}]
  %s16 = inlined_call_operand.vmem [shape: f32[16,12], index: 16, kind: input, shape index: {}]
  %s17 = inlined_call_operand.vmem [shape: f32[16,768], index: 17, kind: input, shape index: {}]
  %s18 = inlined_call_operand.vmem [shape: f32[16,96], index: 18, kind: input, shape index: {}]
  %s19 = inlined_call_operand.vmem [shape: f32[16,48], index: 19, kind: input, shape index: {}]
  %s20 = inlined_call_operand.vmem [shape: f32[16,24], index: 20, kind: input, shape index: {}]
  %s21 = inlined_call_operand.vmem [shape: f32[16,12], index: 21, kind: input, shape index: {}]
  %s22 = inlined_call_operand.vmem [shape: f32[16,1], index: 22, kind: input, shape index: {}]
  %s23 = inlined_call_operand.vmem [shape: f32[8,128], index: 23, kind: output, shape index: {}]
  %s24 = sld [smem:[#allocation0]]
  $region102: #{net_forward.3} parent=0
    _
  %s26 = ssub.s32 1, %s24
  %s27 = scalar_select 0, %s26, %s24
  // Predicated region
  $region2: #{net_forward.3} parent=0 // pred_check
    _
  $region3: #{net_forward.3} parent=0 // pred_check_branch
    %29 = sbr.rel (0) target = $region5
  $region4: #{net_forward.3} parent=0 // pred_region
    _
  $region5: #{net_forward.3} parent=0 // pred_fallthru
    _
  // Predicated region
  $region6: #{net_forward.3} parent=0 // pred_check
    _
  $region7: #{net_forward.3} parent=0 // pred_check_branch
    %31 = sbr.rel (0) target = $region9
  $region8: #{net_forward.3} parent=0 // pred_region
    _
  $region9: #{net_forward.3} parent=0 // pred_fallthru
    _
  // Predicated region
  $region10: #{net_forward.3} parent=0 // pred_check
    _
  $region11: #{net_forward.3} parent=0 // pred_check_branch
    %33 = sbr.rel (0) target = $region13
  $region12: #{net_forward.3} parent=0 // pred_region
    _
  $region13: #{net_forward.3} parent=0 // pred_fallthru
    _
  // Predicated region
  $region14: #{net_forward.3} parent=0 // pred_check
    _
  $region15: #{net_forward.3} parent=0 // pred_check_branch
    %35 = sbr.rel (0) target = $region17
  $region16: #{net_forward.3} parent=0 // pred_region
    _
  $region17: #{net_forward.3} parent=0 // pred_fallthru
    _
  // Predicated region
  $region18: #{net_forward.3} parent=0 // pred_check
    _
  $region19: #{net_forward.3} parent=0 // pred_check_branch
    %37 = sbr.rel (0) target = $region21
  $region20: #{net_forward.3} parent=0 // pred_region
    _
  $region21: #{net_forward.3} parent=0 // pred_fallthru
    _
  // Predicated region
  $region22: #{net_forward.3} parent=0 // pred_check
    _
  $region23: #{net_forward.3} parent=0 // pred_check_branch
    %39 = sbr.rel (0) target = $region25
  $region24: #{net_forward.3} parent=0 // pred_region
    _
  $region25: #{net_forward.3} parent=0 // pred_fallthru
    _
  // Predicated region
  $region26: #{net_forward.3} parent=0 // pred_check
    _
  $region27: #{net_forward.3} parent=0 // pred_check_branch
    %41 = sbr.rel (0) target = $region29
  $region28: #{net_forward.3} parent=0 // pred_region
    _
  $region29: #{net_forward.3} parent=0 // pred_fallthru
    _
  // Predicated region
  $region30: #{net_forward.3} parent=0 // pred_check
    _
  $region31: #{net_forward.3} parent=0 // pred_check_branch
    %43 = sbr.rel (0) target = $region33
  $region32: #{net_forward.3} parent=0 // pred_region
    _
  $region33: #{net_forward.3} parent=0 // pred_fallthru
    _
  // Predicated region
  $region34: #{net_forward.3} parent=0 // pred_check
    _
  $region35: #{net_forward.3} parent=0 // pred_check_branch
    %45 = sbr.rel (0) target = $region37
  $region36: #{net_forward.3} parent=0 // pred_region
    _
  $region37: #{net_forward.3} parent=0 // pred_fallthru
    _
  // Predicated region
  $region38: #{net_forward.3} parent=0 // pred_check
    _
  $region39: #{net_forward.3} parent=0 // pred_check_branch
    %47 = sbr.rel (0) target = $region41
  $region40: #{net_forward.3} parent=0 // pred_region
    _
  $region41: #{net_forward.3} parent=0 // pred_fallthru
    _
  // Predicated region
  $region42: #{net_forward.3} parent=0 // pred_check
    _
  $region43: #{net_forward.3} parent=0 // pred_check_branch
    %49 = sbr.rel (0) target = $region45
  $region44: #{net_forward.3} parent=0 // pred_region
    _
  $region45: #{net_forward.3} parent=0 // pred_fallthru
    _
  // Predicated region
  $region46: #{net_forward.3} parent=0 // pred_check
    _
  $region47: #{net_forward.3} parent=0 // pred_check_branch
    %51 = sbr.rel (0) target = $region49
  $region48: #{net_forward.3} parent=0 // pred_region
    _
  $region49: #{net_forward.3} parent=0 // pred_fallthru
    _
  // Predicated region
  $region50: #{net_forward.3} parent=0 // pred_check
    _
  $region51: #{net_forward.3} parent=0 // pred_check_branch
    %53 = sbr.rel (0) target = $region53
  $region52: #{net_forward.3} parent=0 // pred_region
    _
  $region53: #{net_forward.3} parent=0 // pred_fallthru
    _
  // Predicated region
  $region54: #{net_forward.3} parent=0 // pred_check
    _
  $region55: #{net_forward.3} parent=0 // pred_check_branch
    %55 = sbr.rel (0) target = $region57
  $region56: #{net_forward.3} parent=0 // pred_region
    _
  $region57: #{net_forward.3} parent=0 // pred_fallthru
    _
  // Predicated region
  $region58: #{net_forward.3} parent=0 // pred_check
    _
  $region59: #{net_forward.3} parent=0 // pred_check_branch
    %57 = sbr.rel (0) target = $region61
  $region60: #{net_forward.3} parent=0 // pred_region
    _
  $region61: #{net_forward.3} parent=0 // pred_fallthru
    _
  // Predicated region
  $region62: #{net_forward.3} parent=0 // pred_check
    _
  $region63: #{net_forward.3} parent=0 // pred_check_branch
    %59 = sbr.rel (0) target = $region65
  $region64: #{net_forward.3} parent=0 // pred_region
    _
  $region65: #{net_forward.3} parent=0 // pred_fallthru
    _
  // Predicated region
  $region66: #{net_forward.3} parent=0 // pred_check
    _
  $region67: #{net_forward.3} parent=0 // pred_check_branch
    %61 = sbr.rel (0) target = $region69
  $region68: #{net_forward.3} parent=0 // pred_region
    _
  $region69: #{net_forward.3} parent=0 // pred_fallthru
    _
  // Predicated region
  $region70: #{net_forward.3} parent=0 // pred_check
    _
  $region71: #{net_forward.3} parent=0 // pred_check_branch
    %63 = sbr.rel (0) target = $region73
  $region72: #{net_forward.3} parent=0 // pred_region
    _
  $region73: #{net_forward.3} parent=0 // pred_fallthru
    _
  // Predicated region
  $region74: #{net_forward.3} parent=0 // pred_check
    _
  $region75: #{net_forward.3} parent=0 // pred_check_branch
    %65 = sbr.rel (0) target = $region77
  $region76: #{net_forward.3} parent=0 // pred_region
    _
  $region77: #{net_forward.3} parent=0 // pred_fallthru
    _
  // Predicated region
  $region78: #{net_forward.3} parent=0 // pred_check
    _
  $region79: #{net_forward.3} parent=0 // pred_check_branch
    %67 = sbr.rel (0) target = $region81
  $region80: #{net_forward.3} parent=0 // pred_region
    _
  $region81: #{net_forward.3} parent=0 // pred_fallthru
    _
  // Predicated region
  $region82: #{net_forward.3} parent=0 // pred_check
    _
  $region83: #{net_forward.3} parent=0 // pred_check_branch
    %69 = sbr.rel (0) target = $region85
  $region84: #{net_forward.3} parent=0 // pred_region
    _
  $region85: #{net_forward.3} parent=0 // pred_fallthru
    _
  // Predicated region
  $region86: #{net_forward.3} parent=0 // pred_check
    _
  $region87: #{net_forward.3} parent=0 // pred_check_branch
    %71 = sbr.rel (0) target = $region89
  $region88: #{net_forward.3} parent=0 // pred_region
    _
  $region89: #{net_forward.3} parent=0 // pred_fallthru
    _
  // Predicated region
  $region90: #{net_forward.3} parent=0 // pred_check
    _
  $region91: #{net_forward.3} parent=0 // pred_check_branch
    %73 = sbr.rel (0) target = $region93
  $region92: #{net_forward.3} parent=0 // pred_region
    _
  $region93: #{net_forward.3} parent=0 // pred_fallthru
    _
  %v75 = vld [vmem:[%s0] sm:$0xff]
  %v76 = vld [vmem:[%s0 + $0x8] sm:$0xff]
  %v77 = vld [vmem:[%s0 + $0x10] sm:$0xff]
  %v78 = vld [vmem:[%s0 + $0x18] sm:$0xff]
  %v79 = vld [vmem:[%s0 + $0x20] sm:$0xff]
  %v80 = vld [vmem:[%s0 + $0x28] sm:$0xff]
  %v81 = vld [vmem:[%s0 + $0x30] sm:$0xff]
  %v82 = vld [vmem:[%s0 + $0x38] sm:$0xff]
  %v83 = vld [vmem:[%s0 + $0x40] sm:$0xff]
  %v84 = vld [vmem:[%s0 + $0x48] sm:$0xff]
  %v85 = vld [vmem:[%s0 + $0x50] sm:$0xff]
  %v86 = vld [vmem:[%s0 + $0x58] sm:$0xff]
  %v87 = vmax.f32 %v75, 0.0
  %v88 = vmax.f32 %v76, 0.0
  %v89 = vmax.f32 %v77, 0.0
  %v90 = vmax.f32 %v78, 0.0
  %v91 = vmax.f32 %v79, 0.0
  %v92 = vmax.f32 %v80, 0.0
  %v93 = vmax.f32 %v81, 0.0
  %v94 = vmax.f32 %v82, 0.0
  %v95 = vmax.f32 %v83, 0.0
  %v96 = vmax.f32 %v84, 0.0
  %v97 = vmax.f32 %v85, 0.0
  %v98 = vmax.f32 %v86, 0.0
  %v99 = vld [vmem:[%s12] sm:$0xff]
  %v100 = vld [vmem:[%s12 + $0x8] sm:$0xff]
  %v101 = vld [vmem:[%s12 + $0x10] sm:$0xff]
  %v102 = vld [vmem:[%s12 + $0x18] sm:$0xff]
  %v103 = vld [vmem:[%s12 + $0x20] sm:$0xff]
  %v104 = vld [vmem:[%s12 + $0x28] sm:$0xff]
  %v105 = vld [vmem:[%s12 + $0x30] sm:$0xff]
  %v106 = vld [vmem:[%s12 + $0x38] sm:$0xff]
  %v107 = vld [vmem:[%s12 + $0x40] sm:$0xff]
  %v108 = vld [vmem:[%s12 + $0x48] sm:$0xff]
  %v109 = vld [vmem:[%s12 + $0x50] sm:$0xff]
  %v110 = vld [vmem:[%s12 + $0x58] sm:$0xff]
  %v111 = vmul.f32 %v87, %v99
  %v112 = vmul.f32 %v88, %v100
  %v113 = vmul.f32 %v89, %v101
  %v114 = vmul.f32 %v90, %v102
  %v115 = vmul.f32 %v91, %v103
  %v116 = vmul.f32 %v92, %v104
  %v117 = vmul.f32 %v93, %v105
  %v118 = vmul.f32 %v94, %v106
  %v119 = vmul.f32 %v95, %v107
  %v120 = vmul.f32 %v96, %v108
  %v121 = vmul.f32 %v97, %v109
  %v122 = vmul.f32 %v98, %v110
  %v123 = vld [vmem:[%s2] sm:$0xf]
  %v124 = vld [vmem:[%s2 + $0x4] sm:$0xf]
  %v125 = vld [vmem:[%s2 + $0x8] sm:$0xf]
  %v126 = vld [vmem:[%s2 + $0xc] sm:$0xf]
  %v127 = vld [vmem:[%s2 + $0x10] sm:$0xf]
  %v128 = vld [vmem:[%s2 + $0x14] sm:$0xf]
  %v129 = vld [vmem:[%s2 + $0x18] sm:$0xf]
  %v130 = vld [vmem:[%s2 + $0x1c] sm:$0xf]
  %v131 = vld [vmem:[%s2 + $0x20] sm:$0xf]
  %v132 = vld [vmem:[%s2 + $0x24] sm:$0xf]
  %v133 = vld [vmem:[%s2 + $0x28] sm:$0xf]
  %v134 = vld [vmem:[%s2 + $0x2c] sm:$0xf]
  %v135 = vld [vmem:[%s2 + $0x30] sm:$0xf]
  %v136 = vld [vmem:[%s2 + $0x34] sm:$0xf]
  %v137 = vld [vmem:[%s2 + $0x38] sm:$0xf]
  %v138 = vld [vmem:[%s2 + $0x3c] sm:$0xf]
  %v139 = vld [vmem:[%s2 + $0x40] sm:$0xf]
  %v140 = vld [vmem:[%s2 + $0x44] sm:$0xf]
  %v141 = vld [vmem:[%s2 + $0x48] sm:$0xf]
  %v142 = vld [vmem:[%s2 + $0x4c] sm:$0xf]
  %v143 = vld [vmem:[%s2 + $0x50] sm:$0xf]
  %v144 = vld [vmem:[%s2 + $0x54] sm:$0xf]
  %v145 = vld [vmem:[%s2 + $0x58] sm:$0xf]
  %v146 = vld [vmem:[%s2 + $0x5c] sm:$0xf]
  %v147 = vld [vmem:[%s2 + $0x60] sm:$0xf]
  %v148 = vld [vmem:[%s2 + $0x64] sm:$0xf]
  %v149 = vld [vmem:[%s2 + $0x68] sm:$0xf]
  %v150 = vld [vmem:[%s2 + $0x6c] sm:$0xf]
  %v151 = vld [vmem:[%s2 + $0x70] sm:$0xf]
  %v152 = vld [vmem:[%s2 + $0x74] sm:$0xf]
  %v153 = vld [vmem:[%s2 + $0x78] sm:$0xf]
  %v154 = vld [vmem:[%s2 + $0x7c] sm:$0xf]
  %v155 = vld [vmem:[%s2 + $0x80] sm:$0xf]
  %v156 = vld [vmem:[%s2 + $0x84] sm:$0xf]
  %v157 = vld [vmem:[%s2 + $0x88] sm:$0xf]
  %v158 = vld [vmem:[%s2 + $0x8c] sm:$0xf]
  %v159 = vld [vmem:[%s2 + $0x90] sm:$0xf]
  %v160 = vld [vmem:[%s2 + $0x94] sm:$0xf]
  %v161 = vld [vmem:[%s2 + $0x98] sm:$0xf]
  %v162 = vld [vmem:[%s2 + $0x9c] sm:$0xf]
  %v163 = vld [vmem:[%s2 + $0xa0] sm:$0xf]
  %v164 = vld [vmem:[%s2 + $0xa4] sm:$0xf]
  %v165 = vld [vmem:[%s2 + $0xa8] sm:$0xf]
  %v166 = vld [vmem:[%s2 + $0xac] sm:$0xf]
  %v167 = vld [vmem:[%s2 + $0xb0] sm:$0xf]
  %v168 = vld [vmem:[%s2 + $0xb4] sm:$0xf]
  %v169 = vld [vmem:[%s2 + $0xb8] sm:$0xf]
  %v170 = vld [vmem:[%s2 + $0xbc] sm:$0xf]
  %v171 = vld [vmem:[%s2 + $0xc0] sm:$0xf]
  %v172 = vld [vmem:[%s2 + $0xc4] sm:$0xf]
  %v173 = vld [vmem:[%s2 + $0xc8] sm:$0xf]
  %v174 = vld [vmem:[%s2 + $0xcc] sm:$0xf]
  %v175 = vld [vmem:[%s2 + $0xd0] sm:$0xf]
  %v176 = vld [vmem:[%s2 + $0xd4] sm:$0xf]
  %v177 = vld [vmem:[%s2 + $0xd8] sm:$0xf]
  %v178 = vld [vmem:[%s2 + $0xdc] sm:$0xf]
  %v179 = vld [vmem:[%s2 + $0xe0] sm:$0xf]
  %v180 = vld [vmem:[%s2 + $0xe4] sm:$0xf]
  %v181 = vld [vmem:[%s2 + $0xe8] sm:$0xf]
  %v182 = vld [vmem:[%s2 + $0xec] sm:$0xf]
  %v183 = vld [vmem:[%s2 + $0xf0] sm:$0xf]
  %v184 = vld [vmem:[%s2 + $0xf4] sm:$0xf]
  %v185 = vld [vmem:[%s2 + $0xf8] sm:$0xf]
  %v186 = vld [vmem:[%s2 + $0xfc] sm:$0xf]
  %v187 = vld [vmem:[%s2 + $0x100] sm:$0xf]
  %v188 = vld [vmem:[%s2 + $0x104] sm:$0xf]
  %v189 = vld [vmem:[%s2 + $0x108] sm:$0xf]
  %v190 = vld [vmem:[%s2 + $0x10c] sm:$0xf]
  %v191 = vld [vmem:[%s2 + $0x110] sm:$0xf]
  %v192 = vld [vmem:[%s2 + $0x114] sm:$0xf]
  %v193 = vld [vmem:[%s2 + $0x118] sm:$0xf]
  %v194 = vld [vmem:[%s2 + $0x11c] sm:$0xf]
  %v195 = vld [vmem:[%s2 + $0x120] sm:$0xf]
  %v196 = vld [vmem:[%s2 + $0x124] sm:$0xf]
  %v197 = vld [vmem:[%s2 + $0x128] sm:$0xf]
  %v198 = vld [vmem:[%s2 + $0x12c] sm:$0xf]
  %v199 = vld [vmem:[%s2 + $0x130] sm:$0xf]
  %v200 = vld [vmem:[%s2 + $0x134] sm:$0xf]
  %v201 = vld [vmem:[%s2 + $0x138] sm:$0xf]
  %v202 = vld [vmem:[%s2 + $0x13c] sm:$0xf]
  %v203 = vld [vmem:[%s2 + $0x140] sm:$0xf]
  %v204 = vld [vmem:[%s2 + $0x144] sm:$0xf]
  %v205 = vld [vmem:[%s2 + $0x148] sm:$0xf]
  %v206 = vld [vmem:[%s2 + $0x14c] sm:$0xf]
  %v207 = vld [vmem:[%s2 + $0x150] sm:$0xf]
  %v208 = vld [vmem:[%s2 + $0x154] sm:$0xf]
  %v209 = vld [vmem:[%s2 + $0x158] sm:$0xf]
  %v210 = vld [vmem:[%s2 + $0x15c] sm:$0xf]
  %v211 = vld [vmem:[%s2 + $0x160] sm:$0xf]
  %v212 = vld [vmem:[%s2 + $0x164] sm:$0xf]
  %v213 = vld [vmem:[%s2 + $0x168] sm:$0xf]
  %v214 = vld [vmem:[%s2 + $0x16c] sm:$0xf]
  %v215 = vld [vmem:[%s2 + $0x170] sm:$0xf]
  %v216 = vld [vmem:[%s2 + $0x174] sm:$0xf]
  %v217 = vld [vmem:[%s2 + $0x178] sm:$0xf]
  %v218 = vld [vmem:[%s2 + $0x17c] sm:$0xf]
  %v219 = vpack.c.bf16 %v117, %v111
  %v220 = vpack.c.bf16 %v118, %v112
  %v221 = vpack.c.bf16 %v119, %v113
  %v222 = vpack.c.bf16 %v120, %v114
  %v223 = vpack.c.bf16 %v121, %v115
  %v224 = vpack.c.bf16 %v122, %v116
  %v321 = vunpack.c.l.b16 %v123
  %v322 = vunpack.c.l.b16 %v124
  %v323 = vunpack.c.l.b16 %v125
  %v324 = vunpack.c.l.b16 %v126
  %v325 = vunpack.c.l.b16 %v127
  %v326 = vunpack.c.l.b16 %v128
  %v327 = vunpack.c.l.b16 %v129
  %v328 = vunpack.c.l.b16 %v130
  %v329 = vunpack.c.l.b16 %v131
  %v330 = vunpack.c.l.b16 %v132
  %v331 = vunpack.c.l.b16 %v133
  %v332 = vunpack.c.l.b16 %v134
  %v333 = vunpack.c.l.b16 %v135
  %v334 = vunpack.c.l.b16 %v136
  %v335 = vunpack.c.l.b16 %v137
  %v336 = vunpack.c.l.b16 %v138
  %v337 = vunpack.c.l.b16 %v139
  %v338 = vunpack.c.l.b16 %v140
  %v339 = vunpack.c.l.b16 %v141
  %v340 = vunpack.c.l.b16 %v142
  %v341 = vunpack.c.l.b16 %v143
  %v342 = vunpack.c.l.b16 %v144
  %v343 = vunpack.c.l.b16 %v145
  %v344 = vunpack.c.l.b16 %v146
  %v345 = vunpack.c.l.b16 %v147
  %v346 = vunpack.c.l.b16 %v148
  %v347 = vunpack.c.l.b16 %v149
  %v348 = vunpack.c.l.b16 %v150
  %v349 = vunpack.c.l.b16 %v151
  %v350 = vunpack.c.l.b16 %v152
  %v351 = vunpack.c.l.b16 %v153
  %v352 = vunpack.c.l.b16 %v154
  %v353 = vunpack.c.l.b16 %v155
  %v354 = vunpack.c.l.b16 %v156
  %v355 = vunpack.c.l.b16 %v157
  %v356 = vunpack.c.l.b16 %v158
  %v357 = vunpack.c.l.b16 %v159
  %v358 = vunpack.c.l.b16 %v160
  %v359 = vunpack.c.l.b16 %v161
  %v360 = vunpack.c.l.b16 %v162
  %v361 = vunpack.c.l.b16 %v163
  %v362 = vunpack.c.l.b16 %v164
  %v363 = vunpack.c.l.b16 %v165
  %v364 = vunpack.c.l.b16 %v166
  %v365 = vunpack.c.l.b16 %v167
  %v366 = vunpack.c.l.b16 %v168
  %v367 = vunpack.c.l.b16 %v169
  %v368 = vunpack.c.l.b16 %v170
  %v369 = vunpack.c.l.b16 %v171
  %v370 = vunpack.c.l.b16 %v172
  %v371 = vunpack.c.l.b16 %v173
  %v372 = vunpack.c.l.b16 %v174
  %v373 = vunpack.c.l.b16 %v175
  %v374 = vunpack.c.l.b16 %v176
  %v375 = vunpack.c.l.b16 %v177
  %v376 = vunpack.c.l.b16 %v178
  %v377 = vunpack.c.l.b16 %v179
  %v378 = vunpack.c.l.b16 %v180
  %v379 = vunpack.c.l.b16 %v181
  %v380 = vunpack.c.l.b16 %v182
  %v381 = vunpack.c.l.b16 %v183
  %v382 = vunpack.c.l.b16 %v184
  %v383 = vunpack.c.l.b16 %v185
  %v384 = vunpack.c.l.b16 %v186
  %v385 = vunpack.c.l.b16 %v187
  %v386 = vunpack.c.l.b16 %v188
  %v387 = vunpack.c.l.b16 %v189
  %v388 = vunpack.c.l.b16 %v190
  %v389 = vunpack.c.l.b16 %v191
  %v390 = vunpack.c.l.b16 %v192
  %v391 = vunpack.c.l.b16 %v193
  %v392 = vunpack.c.l.b16 %v194
  %v393 = vunpack.c.l.b16 %v195
  %v394 = vunpack.c.l.b16 %v196
  %v395 = vunpack.c.l.b16 %v197
  %v396 = vunpack.c.l.b16 %v198
  %v397 = vunpack.c.l.b16 %v199
  %v398 = vunpack.c.l.b16 %v200
  %v399 = vunpack.c.l.b16 %v201
  %v400 = vunpack.c.l.b16 %v202
  %v401 = vunpack.c.l.b16 %v203
  %v402 = vunpack.c.l.b16 %v204
  %v403 = vunpack.c.l.b16 %v205
  %v404 = vunpack.c.l.b16 %v206
  %v405 = vunpack.c.l.b16 %v207
  %v406 = vunpack.c.l.b16 %v208
  %v407 = vunpack.c.l.b16 %v209
  %v408 = vunpack.c.l.b16 %v210
  %v409 = vunpack.c.l.b16 %v211
  %v410 = vunpack.c.l.b16 %v212
  %v411 = vunpack.c.l.b16 %v213
  %v412 = vunpack.c.l.b16 %v214
  %v413 = vunpack.c.l.b16 %v215
  %v414 = vunpack.c.l.b16 %v216
  %v415 = vunpack.c.l.b16 %v217
  %v416 = vunpack.c.l.b16 %v218
  %v417 = vpack.c.b16 %v322, %v321
  %v418 = vpack.c.b16 %v324, %v323
  %v419 = vpack.c.b16 %v326, %v325
  %v420 = vpack.c.b16 %v328, %v327
  %v421 = vpack.c.b16 %v330, %v329
  %v422 = vpack.c.b16 %v332, %v331
  %v423 = vpack.c.b16 %v334, %v333
  %v424 = vpack.c.b16 %v336, %v335
  %v425 = vpack.c.b16 %v338, %v337
  %v426 = vpack.c.b16 %v340, %v339
  %v427 = vpack.c.b16 %v342, %v341
  %v428 = vpack.c.b16 %v344, %v343
  %v429 = vpack.c.b16 %v346, %v345
  %v430 = vpack.c.b16 %v348, %v347
  %v431 = vpack.c.b16 %v350, %v349
  %v432 = vpack.c.b16 %v352, %v351
  %v433 = vpack.c.b16 %v354, %v353
  %v434 = vpack.c.b16 %v356, %v355
  %v435 = vpack.c.b16 %v358, %v357
  %v436 = vpack.c.b16 %v360, %v359
  %v437 = vpack.c.b16 %v362, %v361
  %v438 = vpack.c.b16 %v364, %v363
  %v439 = vpack.c.b16 %v366, %v365
  %v440 = vpack.c.b16 %v368, %v367
  %v441 = vpack.c.b16 %v370, %v369
  %v442 = vpack.c.b16 %v372, %v371
  %v443 = vpack.c.b16 %v374, %v373
  %v444 = vpack.c.b16 %v376, %v375
  %v445 = vpack.c.b16 %v378, %v377
  %v446 = vpack.c.b16 %v380, %v379
  %v447 = vpack.c.b16 %v382, %v381
  %v448 = vpack.c.b16 %v384, %v383
  %v449 = vpack.c.b16 %v386, %v385
  %v450 = vpack.c.b16 %v388, %v387
  %v451 = vpack.c.b16 %v390, %v389
  %v452 = vpack.c.b16 %v392, %v391
  %v453 = vpack.c.b16 %v394, %v393
  %v454 = vpack.c.b16 %v396, %v395
  %v455 = vpack.c.b16 %v398, %v397
  %v456 = vpack.c.b16 %v400, %v399
  %v457 = vpack.c.b16 %v402, %v401
  %v458 = vpack.c.b16 %v404, %v403
  %v459 = vpack.c.b16 %v406, %v405
  %v460 = vpack.c.b16 %v408, %v407
  %v461 = vpack.c.b16 %v410, %v409
  %v462 = vpack.c.b16 %v412, %v411
  %v463 = vpack.c.b16 %v414, %v413
  %v464 = vpack.c.b16 %v416, %v415
  %513 = vmatprep.subr.bf16.mxu0 0
  %514 = vmatpush1.bf16.msra.mxu0 %v417
  %515 = vmatprep.subr.bf16.mxu0 0
  %516 = vmatpush1.bf16.msra.mxu0 %v418
  %517 = vmatprep.subr.bf16.mxu0 0
  %518 = vmatpush1.bf16.msra.mxu0 %v419
  %519 = vmatprep.subr.bf16.mxu0 0
  %520 = vmatpush1.bf16.msra.mxu0 %v420
  %521 = vmatprep.subr.bf16.mxu0 0
  %522 = vmatpush1.bf16.msra.mxu0 %v421
  %523 = vmatprep.subr.bf16.mxu0 0
  %524 = vmatpush1.bf16.msra.mxu0 %v422
  %525 = vmatprep.subr.bf16.mxu0 0
  %526 = vmatpush1.bf16.msra.mxu0 %v423
  %527 = vmatprep.subr.bf16.mxu0 0
  %528 = vmatpush1.bf16.msra.mxu0 %v424
  %529 = vmatprep.subr.bf16.mxu0 0
  %530 = vmatpush1.bf16.msra.mxu0 %v425
  %531 = vmatprep.subr.bf16.mxu0 0
  %532 = vmatpush1.bf16.msra.mxu0 %v426
  %533 = vmatprep.subr.bf16.mxu0 0
  %534 = vmatpush1.bf16.msra.mxu0 %v427
  %535 = vmatprep.subr.bf16.mxu0 0
  %536 = vmatpush1.bf16.msra.mxu0 %v428
  %537 = vmatprep.subr.bf16.mxu0 0
  %538 = vmatpush1.bf16.msra.mxu0 %v429
  %539 = vmatprep.subr.bf16.mxu0 0
  %540 = vmatpush1.bf16.msra.mxu0 %v430
  %541 = vmatprep.subr.bf16.mxu0 0
  %542 = vmatpush1.bf16.msra.mxu0 %v431
  %543 = vmatprep.subr.bf16.mxu0 0
  %544 = vmatpush1.bf16.msra.mxu0 %v432
  %545 = vmatprep.mubr.bf16.mxu0 %v220
  %546 = vmatmul.mubr.bf16.gmra.mrb[0].mxu0 %v219
  %v547 = vpop.f32.mrb[0].mxu0
  %v548 = vadd.f32 0.0, %v547
  %v549 = vpop.f32.mrb[0].mxu0
  %v550 = vpop.f32.mrb[0].mxu0
  %v551 = vadd.f32 0.0, %v550
  %v552 = vpop.f32.mrb[0].mxu0
  %553 = vdwg.mxu0
  %554 = vmatprep.subr.bf16.mxu0 0
  %555 = vmatpush1.bf16.msra.mxu0 %v433
  %556 = vmatprep.subr.bf16.mxu0 0
  %557 = vmatpush1.bf16.msra.mxu0 %v434
  %558 = vmatprep.subr.bf16.mxu0 0
  %559 = vmatpush1.bf16.msra.mxu0 %v435
  %560 = vmatprep.subr.bf16.mxu0 0
  %561 = vmatpush1.bf16.msra.mxu0 %v436
  %562 = vmatprep.subr.bf16.mxu0 0
  %563 = vmatpush1.bf16.msra.mxu0 %v437
  %564 = vmatprep.subr.bf16.mxu0 0
  %565 = vmatpush1.bf16.msra.mxu0 %v438
  %566 = vmatprep.subr.bf16.mxu0 0
  %567 = vmatpush1.bf16.msra.mxu0 %v439
  %568 = vmatprep.subr.bf16.mxu0 0
  %569 = vmatpush1.bf16.msra.mxu0 %v440
  %570 = vmatprep.subr.bf16.mxu0 0
  %571 = vmatpush1.bf16.msra.mxu0 %v441
  %572 = vmatprep.subr.bf16.mxu0 0
  %573 = vmatpush1.bf16.msra.mxu0 %v442
  %574 = vmatprep.subr.bf16.mxu0 0
  %575 = vmatpush1.bf16.msra.mxu0 %v443
  %576 = vmatprep.subr.bf16.mxu0 0
  %577 = vmatpush1.bf16.msra.mxu0 %v444
  %578 = vmatprep.subr.bf16.mxu0 0
  %579 = vmatpush1.bf16.msra.mxu0 %v445
  %580 = vmatprep.subr.bf16.mxu0 0
  %581 = vmatpush1.bf16.msra.mxu0 %v446
  %582 = vmatprep.subr.bf16.mxu0 0
  %583 = vmatpush1.bf16.msra.mxu0 %v447
  %584 = vmatprep.subr.bf16.mxu0 0
  %585 = vmatpush1.bf16.msra.mxu0 %v448
  %586 = vmatprep.mubr.bf16.mxu0 %v222
  %587 = vmatmul.mubr.bf16.gmra.mrb[0].mxu0 %v221
  %v588 = vpop.f32.mrb[0].mxu0
  %v589 = vadd.f32 %v548, %v588
  %v590 = vpop.f32.mrb[0].mxu0
  %v591 = vpop.f32.mrb[0].mxu0
  %v592 = vadd.f32 %v551, %v591
  %v593 = vpop.f32.mrb[0].mxu0
  %594 = vdwg.mxu0
  %595 = vmatprep.subr.bf16.mxu0 0
  %596 = vmatpush1.bf16.msra.mxu0 %v449
  %597 = vmatprep.subr.bf16.mxu0 0
  %598 = vmatpush1.bf16.msra.mxu0 %v450
  %599 = vmatprep.subr.bf16.mxu0 0
  %600 = vmatpush1.bf16.msra.mxu0 %v451
  %601 = vmatprep.subr.bf16.mxu0 0
  %602 = vmatpush1.bf16.msra.mxu0 %v452
  %603 = vmatprep.subr.bf16.mxu0 0
  %604 = vmatpush1.bf16.msra.mxu0 %v453
  %605 = vmatprep.subr.bf16.mxu0 0
  %606 = vmatpush1.bf16.msra.mxu0 %v454
  %607 = vmatprep.subr.bf16.mxu0 0
  %608 = vmatpush1.bf16.msra.mxu0 %v455
  %609 = vmatprep.subr.bf16.mxu0 0
  %610 = vmatpush1.bf16.msra.mxu0 %v456
  %611 = vmatprep.subr.bf16.mxu0 0
  %612 = vmatpush1.bf16.msra.mxu0 %v457
  %613 = vmatprep.subr.bf16.mxu0 0
  %614 = vmatpush1.bf16.msra.mxu0 %v458
  %615 = vmatprep.subr.bf16.mxu0 0
  %616 = vmatpush1.bf16.msra.mxu0 %v459
  %617 = vmatprep.subr.bf16.mxu0 0
  %618 = vmatpush1.bf16.msra.mxu0 %v460
  %619 = vmatprep.subr.bf16.mxu0 0
  %620 = vmatpush1.bf16.msra.mxu0 %v461
  %621 = vmatprep.subr.bf16.mxu0 0
  %622 = vmatpush1.bf16.msra.mxu0 %v462
  %623 = vmatprep.subr.bf16.mxu0 0
  %624 = vmatpush1.bf16.msra.mxu0 %v463
  %625 = vmatprep.subr.bf16.mxu0 0
  %626 = vmatpush1.bf16.msra.mxu0 %v464
  %627 = vmatprep.mubr.bf16.mxu0 %v224
  %628 = vmatmul.mubr.bf16.gmra.mrb[0].mxu0 %v223
  %v629 = vpop.f32.mrb[0].mxu0
  %v630 = vadd.f32 %v589, %v629
  %v631 = vpop.f32.mrb[0].mxu0
  %v632 = vpop.f32.mrb[0].mxu0
  %v633 = vadd.f32 %v592, %v632
  %v634 = vpop.f32.mrb[0].mxu0
  %635 = vdwg.mxu0
  %v636 = vmax.f32 %v630, 0.0
  %v637 = vmax.f32 %v633, 0.0
  %v638 = vld [vmem:[%s13] sm:$0xff]
  %v639 = vld [vmem:[%s13 + $0x8] sm:$0xff]
  %v640 = vmul.f32 %v636, %v638
  %v641 = vmul.f32 %v637, %v639
  %v642 = vld [vmem:[%s3] sm:$0xf]
  %v643 = vld [vmem:[%s3 + $0x4] sm:$0xf]
  %v644 = vld [vmem:[%s3 + $0x8] sm:$0xf]
  %v645 = vld [vmem:[%s3 + $0xc] sm:$0xf]
  %v646 = vld [vmem:[%s3 + $0x10] sm:$0xf]
  %v647 = vld [vmem:[%s3 + $0x14] sm:$0xf]
  %v648 = vld [vmem:[%s3 + $0x18] sm:$0xf]
  %v649 = vld [vmem:[%s3 + $0x1c] sm:$0xf]
  %v650 = vld [vmem:[%s3 + $0x20] sm:$0xf]
  %v651 = vld [vmem:[%s3 + $0x24] sm:$0xf]
  %v652 = vld [vmem:[%s3 + $0x28] sm:$0xf]
  %v653 = vld [vmem:[%s3 + $0x2c] sm:$0xf]
  %v654 = vpack.c.bf16 %v641, %v640
  %v667 = vunpack.c.l.b16 %v642
  %v668 = vunpack.c.l.b16 %v643
  %v669 = vunpack.c.l.b16 %v644
  %v670 = vunpack.c.l.b16 %v645
  %v671 = vunpack.c.l.b16 %v646
  %v672 = vunpack.c.l.b16 %v647
  %v673 = vunpack.c.l.b16 %v648
  %v674 = vunpack.c.l.b16 %v649
  %v675 = vunpack.c.l.b16 %v650
  %v676 = vunpack.c.l.b16 %v651
  %v677 = vunpack.c.l.b16 %v652
  %v678 = vunpack.c.l.b16 %v653
  %v679 = vpack.c.b16 %v668, %v667
  %v680 = vpack.c.b16 %v670, %v669
  %v681 = vpack.c.b16 %v672, %v671
  %v682 = vpack.c.b16 %v674, %v673
  %v683 = vpack.c.b16 %v676, %v675
  %v684 = vpack.c.b16 %v678, %v677
  %vm691 = vcmask 785408
  %v693 = vsel %vm691, %v654, 0
  %695 = vmatprep.subr.bf16.mxu0 0
  %696 = vmatpush1.bf16.msra.mxu0 %v679
  %697 = vmatprep.subr.bf16.mxu0 0
  %698 = vmatpush1.bf16.msra.mxu0 %v680
  %699 = vmatprep.subr.bf16.mxu0 0
  %700 = vmatpush1.bf16.msra.mxu0 %v681
  %701 = vmatprep.subr.bf16.mxu0 0
  %702 = vmatpush1.bf16.msra.mxu0 %v682
  %703 = vmatprep.subr.bf16.mxu0 0
  %704 = vmatpush1.bf16.msra.mxu0 %v683
  %705 = vmatprep.subr.bf16.mxu0 0
  %706 = vmatpush1.bf16.msra.mxu0 %v684
  %707 = vmatprep.subr.bf16.mxu0 0
  %708 = vmatpush1.bf16.msra.mxu0 0
  %709 = vmatprep.subr.bf16.mxu0 0
  %710 = vmatpush1.bf16.msra.mxu0 0
  %711 = vmatprep.subr.bf16.mxu0 0
  %712 = vmatpush1.bf16.msra.mxu0 0
  %713 = vmatprep.subr.bf16.mxu0 0
  %714 = vmatpush1.bf16.msra.mxu0 0
  %715 = vmatprep.subr.bf16.mxu0 0
  %716 = vmatpush1.bf16.msra.mxu0 0
  %717 = vmatprep.subr.bf16.mxu0 0
  %718 = vmatpush1.bf16.msra.mxu0 0
  %719 = vmatprep.subr.bf16.mxu0 0
  %720 = vmatpush1.bf16.msra.mxu0 0
  %721 = vmatprep.subr.bf16.mxu0 0
  %722 = vmatpush1.bf16.msra.mxu0 0
  %723 = vmatprep.subr.bf16.mxu0 0
  %724 = vmatpush1.bf16.msra.mxu0 0
  %725 = vmatprep.subr.bf16.mxu0 0
  %726 = vmatpush1.bf16.msra.mxu0 0
  %727 = vmatprep.mubr.bf16.mxu0 0
  %728 = vmatmul.mubr.bf16.gmra.mrb[0].mxu0 %v693
  %v729 = vpop.f32.mrb[0].mxu0
  %v730 = vadd.f32 0.0, %v729
  %v731 = vpop.f32.mrb[0].mxu0
  %v732 = vpop.f32.mrb[0].mxu0
  %v733 = vadd.f32 0.0, %v732
  %v734 = vpop.f32.mrb[0].mxu0
  %735 = vdwg.mxu0
  %v736 = vmax.f32 %v730, 0.0
  %v737 = vmax.f32 %v733, 0.0
  %v738 = vld [vmem:[%s14] sm:$0xff]
  %v739 = vld [vmem:[%s14 + $0x8] sm:$0xff]
  %v740 = vmul.f32 %v736, %v738
  %v741 = vmul.f32 %v737, %v739
  %v742 = vld [vmem:[%s4] sm:$0xf]
  %v743 = vld [vmem:[%s4 + $0x4] sm:$0xf]
  %v744 = vld [vmem:[%s4 + $0x8] sm:$0xf]
  %v745 = vld [vmem:[%s4 + $0xc] sm:$0xf]
  %v746 = vld [vmem:[%s4 + $0x10] sm:$0xf]
  %v747 = vld [vmem:[%s4 + $0x14] sm:$0xf]
  %v748 = vpack.c.bf16 %v741, %v740
  %v755 = vunpack.c.l.b16 %v742
  %v756 = vunpack.c.l.b16 %v743
  %v757 = vunpack.c.l.b16 %v744
  %v758 = vunpack.c.l.b16 %v745
  %v759 = vunpack.c.l.b16 %v746
  %v760 = vunpack.c.l.b16 %v747
  %v761 = vpack.c.b16 %v756, %v755
  %v762 = vpack.c.b16 %v758, %v757
  %v763 = vpack.c.b16 %v760, %v759
  %vm767 = vcmask 392192
  %v769 = vsel %vm767, %v748, 0
  %771 = vmatprep.subr.bf16.mxu0 0
  %772 = vmatpush1.bf16.msra.mxu0 %v761
  %773 = vmatprep.subr.bf16.mxu0 0
  %774 = vmatpush1.bf16.msra.mxu0 %v762
  %775 = vmatprep.subr.bf16.mxu0 0
  %776 = vmatpush1.bf16.msra.mxu0 %v763
  %777 = vmatprep.subr.bf16.mxu0 0
  %778 = vmatpush1.bf16.msra.mxu0 0
  %779 = vmatprep.subr.bf16.mxu0 0
  %780 = vmatpush1.bf16.msra.mxu0 0
  %781 = vmatprep.subr.bf16.mxu0 0
  %782 = vmatpush1.bf16.msra.mxu0 0
  %783 = vmatprep.subr.bf16.mxu0 0
  %784 = vmatpush1.bf16.msra.mxu0 0
  %785 = vmatprep.subr.bf16.mxu0 0
  %786 = vmatpush1.bf16.msra.mxu0 0
  %787 = vmatprep.subr.bf16.mxu0 0
  %788 = vmatpush1.bf16.msra.mxu0 0
  %789 = vmatprep.subr.bf16.mxu0 0
  %790 = vmatpush1.bf16.msra.mxu0 0
  %791 = vmatprep.subr.bf16.mxu0 0
  %792 = vmatpush1.bf16.msra.mxu0 0
  %793 = vmatprep.subr.bf16.mxu0 0
  %794 = vmatpush1.bf16.msra.mxu0 0
  %795 = vmatprep.subr.bf16.mxu0 0
  %796 = vmatpush1.bf16.msra.mxu0 0
  %797 = vmatprep.subr.bf16.mxu0 0
  %798 = vmatpush1.bf16.msra.mxu0 0
  %799 = vmatprep.subr.bf16.mxu0 0
  %800 = vmatpush1.bf16.msra.mxu0 0
  %801 = vmatprep.subr.bf16.mxu0 0
  %802 = vmatpush1.bf16.msra.mxu0 0
  %803 = vmatprep.mubr.bf16.mxu0 0
  %804 = vmatmul.mubr.bf16.gmra.mrb[0].mxu0 %v769
  %v805 = vpop.f32.mrb[0].mxu0
  %v806 = vadd.f32 0.0, %v805
  %v807 = vpop.f32.mrb[0].mxu0
  %v808 = vpop.f32.mrb[0].mxu0
  %v809 = vadd.f32 0.0, %v808
  %v810 = vpop.f32.mrb[0].mxu0
  %811 = vdwg.mxu0
  %v812 = vmax.f32 %v806, 0.0
  %v813 = vmax.f32 %v809, 0.0
  %v814 = vld [vmem:[%s15] sm:$0xff]
  %v815 = vld [vmem:[%s15 + $0x8] sm:$0xff]
  %v816 = vmul.f32 %v812, %v814
  %v817 = vmul.f32 %v813, %v815
  %v818 = vld [vmem:[%s5] sm:$0xf]
  %v819 = vld [vmem:[%s5 + $0x4] sm:$0xf]
  %v820 = vld [vmem:[%s5 + $0x8] sm:$0xf]
  %v821 = vpack.c.bf16 %v817, %v816
  %v825 = vunpack.c.l.b16 %v818
  %v826 = vunpack.c.l.b16 %v819
  %v827 = vunpack.c.l.b16 %v820
  %v828 = vpack.c.b16 %v826, %v825
  %v829 = vpack.c.b16 %v827, %v827
  %vm831 = vcmask 195584
  %v833 = vsel %vm831, %v821, 0
  %vm835 = vcmask 1043456
  %v837 = vsel %vm835, %v829, 0
  %839 = vmatprep.subr.bf16.mxu0 0
  %840 = vmatpush1.bf16.msra.mxu0 %v828
  %841 = vmatprep.subr.bf16.mxu0 0
  %842 = vmatpush1.bf16.msra.mxu0 %v837
  %843 = vmatprep.subr.bf16.mxu0 0
  %844 = vmatpush1.bf16.msra.mxu0 0
  %845 = vmatprep.subr.bf16.mxu0 0
  %846 = vmatpush1.bf16.msra.mxu0 0
  %847 = vmatprep.subr.bf16.mxu0 0
  %848 = vmatpush1.bf16.msra.mxu0 0
  %849 = vmatprep.subr.bf16.mxu0 0
  %850 = vmatpush1.bf16.msra.mxu0 0
  %851 = vmatprep.subr.bf16.mxu0 0
  %852 = vmatpush1.bf16.msra.mxu0 0
  %853 = vmatprep.subr.bf16.mxu0 0
  %854 = vmatpush1.bf16.msra.mxu0 0
  %855 = vmatprep.subr.bf16.mxu0 0
  %856 = vmatpush1.bf16.msra.mxu0 0
  %857 = vmatprep.subr.bf16.mxu0 0
  %858 = vmatpush1.bf16.msra.mxu0 0
  %859 = vmatprep.subr.bf16.mxu0 0
  %860 = vmatpush1.bf16.msra.mxu0 0
  %861 = vmatprep.subr.bf16.mxu0 0
  %862 = vmatpush1.bf16.msra.mxu0 0
  %863 = vmatprep.subr.bf16.mxu0 0
  %864 = vmatpush1.bf16.msra.mxu0 0
  %865 = vmatprep.subr.bf16.mxu0 0
  %866 = vmatpush1.bf16.msra.mxu0 0
  %867 = vmatprep.subr.bf16.mxu0 0
  %868 = vmatpush1.bf16.msra.mxu0 0
  %869 = vmatprep.subr.bf16.mxu0 0
  %870 = vmatpush1.bf16.msra.mxu0 0
  %871 = vmatprep.mubr.bf16.mxu0 0
  %872 = vmatmul.mubr.bf16.gmra.mrb[0].mxu0 %v833
  %v873 = vpop.f32.mrb[0].mxu0
  %v874 = vadd.f32 0.0, %v873
  %v875 = vpop.f32.mrb[0].mxu0
  %v876 = vpop.f32.mrb[0].mxu0
  %v877 = vadd.f32 0.0, %v876
  %v878 = vpop.f32.mrb[0].mxu0
  %879 = vdwg.mxu0
  %v880 = vmax.f32 %v874, 0.0
  %v881 = vmax.f32 %v877, 0.0
  %v882 = vld [vmem:[%s16] sm:$0xff]
  %v883 = vld [vmem:[%s16 + $0x8] sm:$0xff]
  %v884 = vmul.f32 %v880, %v882
  %v885 = vmul.f32 %v881, %v883
  %v886 = vld [vmem:[%s6] sm:$0xf]
  %v887 = vld [vmem:[%s6 + $0x4] sm:$0x3]
  %v888 = vpack.c.bf16 %v885, %v884
  %v891 = vunpack.c.l.b16 %v886
  %v892 = vunpack.c.l.b16 %v887
  %v893 = vpack.c.b16 %v892, %v891
  %vm894 = vcmask 97280
  %v896 = vsel %vm894, %v888, 0
  %vm898 = vcmask 1045504
  %v900 = vsel %vm898, %v893, 0
  %902 = vmatprep.subr.bf16.mxu0 0
  %903 = vmatpush1.bf16.msra.mxu0 %v900
  %904 = vmatprep.subr.bf16.mxu0 0
  %905 = vmatpush1.bf16.msra.mxu0 0
  %906 = vmatprep.subr.bf16.mxu0 0
  %907 = vmatpush1.bf16.msra.mxu0 0
  %908 = vmatprep.subr.bf16.mxu0 0
  %909 = vmatpush1.bf16.msra.mxu0 0
  %910 = vmatprep.subr.bf16.mxu0 0
  %911 = vmatpush1.bf16.msra.mxu0 0
  %912 = vmatprep.subr.bf16.mxu0 0
  %913 = vmatpush1.bf16.msra.mxu0 0
  %914 = vmatprep.subr.bf16.mxu0 0
  %915 = vmatpush1.bf16.msra.mxu0 0
  %916 = vmatprep.subr.bf16.mxu0 0
  %917 = vmatpush1.bf16.msra.mxu0 0
  %918 = vmatprep.subr.bf16.mxu0 0
  %919 = vmatpush1.bf16.msra.mxu0 0
  %920 = vmatprep.subr.bf16.mxu0 0
  %921 = vmatpush1.bf16.msra.mxu0 0
  %922 = vmatprep.subr.bf16.mxu0 0
  %923 = vmatpush1.bf16.msra.mxu0 0
  %924 = vmatprep.subr.bf16.mxu0 0
  %925 = vmatpush1.bf16.msra.mxu0 0
  %926 = vmatprep.subr.bf16.mxu0 0
  %927 = vmatpush1.bf16.msra.mxu0 0
  %928 = vmatprep.subr.bf16.mxu0 0
  %929 = vmatpush1.bf16.msra.mxu0 0
  %930 = vmatprep.subr.bf16.mxu0 0
  %931 = vmatpush1.bf16.msra.mxu0 0
  %932 = vmatprep.subr.bf16.mxu0 0
  %933 = vmatpush1.bf16.msra.mxu0 0
  %934 = vmatprep.mubr.bf16.mxu0 0
  %935 = vmatmul.mubr.bf16.gmra.mrb[0].mxu0 %v896
  %v936 = vpop.f32.mrb[0].mxu0
  %v937 = vadd.f32 0.0, %v936
  %v938 = vpop.f32.mrb[0].mxu0
  %v939 = vpop.f32.mrb[0].mxu0
  %v940 = vadd.f32 0.0, %v939
  %v941 = vpop.f32.mrb[0].mxu0
  %942 = vdwg.mxu0
  %v943 = vld [vmem:[%s1] sm:$0xff]
  %v944 = vld [vmem:[%s1 + $0x8] sm:$0xff]
  %v945 = vld [vmem:[%s1 + $0x10] sm:$0xff]
  %v946 = vld [vmem:[%s1 + $0x18] sm:$0xff]
  %v947 = vld [vmem:[%s1 + $0x20] sm:$0xff]
  %v948 = vld [vmem:[%s1 + $0x28] sm:$0xff]
  %v949 = vld [vmem:[%s1 + $0x30] sm:$0xff]
  %v950 = vld [vmem:[%s1 + $0x38] sm:$0xff]
  %v951 = vld [vmem:[%s1 + $0x40] sm:$0xff]
  %v952 = vld [vmem:[%s1 + $0x48] sm:$0xff]
  %v953 = vld [vmem:[%s1 + $0x50] sm:$0xff]
  %v954 = vld [vmem:[%s1 + $0x58] sm:$0xff]
  %v955 = vmax.f32 %v943, 0.0
  %v956 = vmax.f32 %v944, 0.0
  %v957 = vmax.f32 %v945, 0.0
  %v958 = vmax.f32 %v946, 0.0
  %v959 = vmax.f32 %v947, 0.0
  %v960 = vmax.f32 %v948, 0.0
  %v961 = vmax.f32 %v949, 0.0
  %v962 = vmax.f32 %v950, 0.0
  %v963 = vmax.f32 %v951, 0.0
  %v964 = vmax.f32 %v952, 0.0
  %v965 = vmax.f32 %v953, 0.0
  %v966 = vmax.f32 %v954, 0.0
  %v967 = vld [vmem:[%s17] sm:$0xff]
  %v968 = vld [vmem:[%s17 + $0x8] sm:$0xff]
  %v969 = vld [vmem:[%s17 + $0x10] sm:$0xff]
  %v970 = vld [vmem:[%s17 + $0x18] sm:$0xff]
  %v971 = vld [vmem:[%s17 + $0x20] sm:$0xff]
  %v972 = vld [vmem:[%s17 + $0x28] sm:$0xff]
  %v973 = vld [vmem:[%s17 + $0x30] sm:$0xff]
  %v974 = vld [vmem:[%s17 + $0x38] sm:$0xff]
  %v975 = vld [vmem:[%s17 + $0x40] sm:$0xff]
  %v976 = vld [vmem:[%s17 + $0x48] sm:$0xff]
  %v977 = vld [vmem:[%s17 + $0x50] sm:$0xff]
  %v978 = vld [vmem:[%s17 + $0x58] sm:$0xff]
  %v979 = vmul.f32 %v955, %v967
  %v980 = vmul.f32 %v956, %v968
  %v981 = vmul.f32 %v957, %v969
  %v982 = vmul.f32 %v958, %v970
  %v983 = vmul.f32 %v959, %v971
  %v984 = vmul.f32 %v960, %v972
  %v985 = vmul.f32 %v961, %v973
  %v986 = vmul.f32 %v962, %v974
  %v987 = vmul.f32 %v963, %v975
  %v988 = vmul.f32 %v964, %v976
  %v989 = vmul.f32 %v965, %v977
  %v990 = vmul.f32 %v966, %v978
  %v991 = vld [vmem:[%s7] sm:$0xf]
  %v992 = vld [vmem:[%s7 + $0x4] sm:$0xf]
  %v993 = vld [vmem:[%s7 + $0x8] sm:$0xf]
  %v994 = vld [vmem:[%s7 + $0xc] sm:$0xf]
  %v995 = vld [vmem:[%s7 + $0x10] sm:$0xf]
  %v996 = vld [vmem:[%s7 + $0x14] sm:$0xf]
  %v997 = vld [vmem:[%s7 + $0x18] sm:$0xf]
  %v998 = vld [vmem:[%s7 + $0x1c] sm:$0xf]
  %v999 = vld [vmem:[%s7 + $0x20] sm:$0xf]
  %v1000 = vld [vmem:[%s7 + $0x24] sm:$0xf]
  %v1001 = vld [vmem:[%s7 + $0x28] sm:$0xf]
  %v1002 = vld [vmem:[%s7 + $0x2c] sm:$0xf]
  %v1003 = vld [vmem:[%s7 + $0x30] sm:$0xf]
  %v1004 = vld [vmem:[%s7 + $0x34] sm:$0xf]
  %v1005 = vld [vmem:[%s7 + $0x38] sm:$0xf]
  %v1006 = vld [vmem:[%s7 + $0x3c] sm:$0xf]
  %v1007 = vld [vmem:[%s7 + $0x40] sm:$0xf]
  %v1008 = vld [vmem:[%s7 + $0x44] sm:$0xf]
  %v1009 = vld [vmem:[%s7 + $0x48] sm:$0xf]
  %v1010 = vld [vmem:[%s7 + $0x4c] sm:$0xf]
  %v1011 = vld [vmem:[%s7 + $0x50] sm:$0xf]
  %v1012 = vld [vmem:[%s7 + $0x54] sm:$0xf]
  %v1013 = vld [vmem:[%s7 + $0x58] sm:$0xf]
  %v1014 = vld [vmem:[%s7 + $0x5c] sm:$0xf]
  %v1015 = vld [vmem:[%s7 + $0x60] sm:$0xf]
  %v1016 = vld [vmem:[%s7 + $0x64] sm:$0xf]
  %v1017 = vld [vmem:[%s7 + $0x68] sm:$0xf]
  %v1018 = vld [vmem:[%s7 + $0x6c] sm:$0xf]
  %v1019 = vld [vmem:[%s7 + $0x70] sm:$0xf]
  %v1020 = vld [vmem:[%s7 + $0x74] sm:$0xf]
  %v1021 = vld [vmem:[%s7 + $0x78] sm:$0xf]
  %v1022 = vld [vmem:[%s7 + $0x7c] sm:$0xf]
  %v1023 = vld [vmem:[%s7 + $0x80] sm:$0xf]
  %v1024 = vld [vmem:[%s7 + $0x84] sm:$0xf]
  %v1025 = vld [vmem:[%s7 + $0x88] sm:$0xf]
  %v1026 = vld [vmem:[%s7 + $0x8c] sm:$0xf]
  %v1027 = vld [vmem:[%s7 + $0x90] sm:$0xf]
  %v1028 = vld [vmem:[%s7 + $0x94] sm:$0xf]
  %v1029 = vld [vmem:[%s7 + $0x98] sm:$0xf]
  %v1030 = vld [vmem:[%s7 + $0x9c] sm:$0xf]
  %v1031 = vld [vmem:[%s7 + $0xa0] sm:$0xf]
  %v1032 = vld [vmem:[%s7 + $0xa4] sm:$0xf]
  %v1033 = vld [vmem:[%s7 + $0xa8] sm:$0xf]
  %v1034 = vld [vmem:[%s7 + $0xac] sm:$0xf]
  %v1035 = vld [vmem:[%s7 + $0xb0] sm:$0xf]
  %v1036 = vld [vmem:[%s7 + $0xb4] sm:$0xf]
  %v1037 = vld [vmem:[%s7 + $0xb8] sm:$0xf]
  %v1038 = vld [vmem:[%s7 + $0xbc] sm:$0xf]
  %v1039 = vld [vmem:[%s7 + $0xc0] sm:$0xf]
  %v1040 = vld [vmem:[%s7 + $0xc4] sm:$0xf]
  %v1041 = vld [vmem:[%s7 + $0xc8] sm:$0xf]
  %v1042 = vld [vmem:[%s7 + $0xcc] sm:$0xf]
  %v1043 = vld [vmem:[%s7 + $0xd0] sm:$0xf]
  %v1044 = vld [vmem:[%s7 + $0xd4] sm:$0xf]
  %v1045 = vld [vmem:[%s7 + $0xd8] sm:$0xf]
  %v1046 = vld [vmem:[%s7 + $0xdc] sm:$0xf]
  %v1047 = vld [vmem:[%s7 + $0xe0] sm:$0xf]
  %v1048 = vld [vmem:[%s7 + $0xe4] sm:$0xf]
  %v1049 = vld [vmem:[%s7 + $0xe8] sm:$0xf]
  %v1050 = vld [vmem:[%s7 + $0xec] sm:$0xf]
  %v1051 = vld [vmem:[%s7 + $0xf0] sm:$0xf]
  %v1052 = vld [vmem:[%s7 + $0xf4] sm:$0xf]
  %v1053 = vld [vmem:[%s7 + $0xf8] sm:$0xf]
  %v1054 = vld [vmem:[%s7 + $0xfc] sm:$0xf]
  %v1055 = vld [vmem:[%s7 + $0x100] sm:$0xf]
  %v1056 = vld [vmem:[%s7 + $0x104] sm:$0xf]
  %v1057 = vld [vmem:[%s7 + $0x108] sm:$0xf]
  %v1058 = vld [vmem:[%s7 + $0x10c] sm:$0xf]
  %v1059 = vld [vmem:[%s7 + $0x110] sm:$0xf]
  %v1060 = vld [vmem:[%s7 + $0x114] sm:$0xf]
  %v1061 = vld [vmem:[%s7 + $0x118] sm:$0xf]
  %v1062 = vld [vmem:[%s7 + $0x11c] sm:$0xf]
  %v1063 = vld [vmem:[%s7 + $0x120] sm:$0xf]
  %v1064 = vld [vmem:[%s7 + $0x124] sm:$0xf]
  %v1065 = vld [vmem:[%s7 + $0x128] sm:$0xf]
  %v1066 = vld [vmem:[%s7 + $0x12c] sm:$0xf]
  %v1067 = vld [vmem:[%s7 + $0x130] sm:$0xf]
  %v1068 = vld [vmem:[%s7 + $0x134] sm:$0xf]
  %v1069 = vld [vmem:[%s7 + $0x138] sm:$0xf]
  %v1070 = vld [vmem:[%s7 + $0x13c] sm:$0xf]
  %v1071 = vld [vmem:[%s7 + $0x140] sm:$0xf]
  %v1072 = vld [vmem:[%s7 + $0x144] sm:$0xf]
  %v1073 = vld [vmem:[%s7 + $0x148] sm:$0xf]
  %v1074 = vld [vmem:[%s7 + $0x14c] sm:$0xf]
  %v1075 = vld [vmem:[%s7 + $0x150] sm:$0xf]
  %v1076 = vld [vmem:[%s7 + $0x154] sm:$0xf]
  %v1077 = vld [vmem:[%s7 + $0x158] sm:$0xf]
  %v1078 = vld [vmem:[%s7 + $0x15c] sm:$0xf]
  %v1079 = vld [vmem:[%s7 + $0x160] sm:$0xf]
  %v1080 = vld [vmem:[%s7 + $0x164] sm:$0xf]
  %v1081 = vld [vmem:[%s7 + $0x168] sm:$0xf]
  %v1082 = vld [vmem:[%s7 + $0x16c] sm:$0xf]
  %v1083 = vld [vmem:[%s7 + $0x170] sm:$0xf]
  %v1084 = vld [vmem:[%s7 + $0x174] sm:$0xf]
  %v1085 = vld [vmem:[%s7 + $0x178] sm:$0xf]
  %v1086 = vld [vmem:[%s7 + $0x17c] sm:$0xf]
  %v1087 = vpack.c.bf16 %v985, %v979
  %v1088 = vpack.c.bf16 %v986, %v980
  %v1089 = vpack.c.bf16 %v987, %v981
  %v1090 = vpack.c.bf16 %v988, %v982
  %v1091 = vpack.c.bf16 %v989, %v983
  %v1092 = vpack.c.bf16 %v990, %v984
  %v1189 = vunpack.c.l.b16 %v991
  %v1190 = vunpack.c.l.b16 %v992
  %v1191 = vunpack.c.l.b16 %v993
  %v1192 = vunpack.c.l.b16 %v994
  %v1193 = vunpack.c.l.b16 %v995
  %v1194 = vunpack.c.l.b16 %v996
  %v1195 = vunpack.c.l.b16 %v997
  %v1196 = vunpack.c.l.b16 %v998
  %v1197 = vunpack.c.l.b16 %v999
  %v1198 = vunpack.c.l.b16 %v1000
  %v1199 = vunpack.c.l.b16 %v1001
  %v1200 = vunpack.c.l.b16 %v1002
  %v1201 = vunpack.c.l.b16 %v1003
  %v1202 = vunpack.c.l.b16 %v1004
  %v1203 = vunpack.c.l.b16 %v1005
  %v1204 = vunpack.c.l.b16 %v1006
  %v1205 = vunpack.c.l.b16 %v1007
  %v1206 = vunpack.c.l.b16 %v1008
  %v1207 = vunpack.c.l.b16 %v1009
  %v1208 = vunpack.c.l.b16 %v1010
  %v1209 = vunpack.c.l.b16 %v1011
  %v1210 = vunpack.c.l.b16 %v1012
  %v1211 = vunpack.c.l.b16 %v1013
  %v1212 = vunpack.c.l.b16 %v1014
  %v1213 = vunpack.c.l.b16 %v1015
  %v1214 = vunpack.c.l.b16 %v1016
  %v1215 = vunpack.c.l.b16 %v1017
  %v1216 = vunpack.c.l.b16 %v1018
  %v1217 = vunpack.c.l.b16 %v1019
  %v1218 = vunpack.c.l.b16 %v1020
  %v1219 = vunpack.c.l.b16 %v1021
  %v1220 = vunpack.c.l.b16 %v1022
  %v1221 = vunpack.c.l.b16 %v1023
  %v1222 = vunpack.c.l.b16 %v1024
  %v1223 = vunpack.c.l.b16 %v1025
  %v1224 = vunpack.c.l.b16 %v1026
  %v1225 = vunpack.c.l.b16 %v1027
  %v1226 = vunpack.c.l.b16 %v1028
  %v1227 = vunpack.c.l.b16 %v1029
  %v1228 = vunpack.c.l.b16 %v1030
  %v1229 = vunpack.c.l.b16 %v1031
  %v1230 = vunpack.c.l.b16 %v1032
  %v1231 = vunpack.c.l.b16 %v1033
  %v1232 = vunpack.c.l.b16 %v1034
  %v1233 = vunpack.c.l.b16 %v1035
  %v1234 = vunpack.c.l.b16 %v1036
  %v1235 = vunpack.c.l.b16 %v1037
  %v1236 = vunpack.c.l.b16 %v1038
  %v1237 = vunpack.c.l.b16 %v1039
  %v1238 = vunpack.c.l.b16 %v1040
  %v1239 = vunpack.c.l.b16 %v1041
  %v1240 = vunpack.c.l.b16 %v1042
  %v1241 = vunpack.c.l.b16 %v1043
  %v1242 = vunpack.c.l.b16 %v1044
  %v1243 = vunpack.c.l.b16 %v1045
  %v1244 = vunpack.c.l.b16 %v1046
  %v1245 = vunpack.c.l.b16 %v1047
  %v1246 = vunpack.c.l.b16 %v1048
  %v1247 = vunpack.c.l.b16 %v1049
  %v1248 = vunpack.c.l.b16 %v1050
  %v1249 = vunpack.c.l.b16 %v1051
  %v1250 = vunpack.c.l.b16 %v1052
  %v1251 = vunpack.c.l.b16 %v1053
  %v1252 = vunpack.c.l.b16 %v1054
  %v1253 = vunpack.c.l.b16 %v1055
  %v1254 = vunpack.c.l.b16 %v1056
  %v1255 = vunpack.c.l.b16 %v1057
  %v1256 = vunpack.c.l.b16 %v1058
  %v1257 = vunpack.c.l.b16 %v1059
  %v1258 = vunpack.c.l.b16 %v1060
  %v1259 = vunpack.c.l.b16 %v1061
  %v1260 = vunpack.c.l.b16 %v1062
  %v1261 = vunpack.c.l.b16 %v1063
  %v1262 = vunpack.c.l.b16 %v1064
  %v1263 = vunpack.c.l.b16 %v1065
  %v1264 = vunpack.c.l.b16 %v1066
  %v1265 = vunpack.c.l.b16 %v1067
  %v1266 = vunpack.c.l.b16 %v1068
  %v1267 = vunpack.c.l.b16 %v1069
  %v1268 = vunpack.c.l.b16 %v1070
  %v1269 = vunpack.c.l.b16 %v1071
  %v1270 = vunpack.c.l.b16 %v1072
  %v1271 = vunpack.c.l.b16 %v1073
  %v1272 = vunpack.c.l.b16 %v1074
  %v1273 = vunpack.c.l.b16 %v1075
  %v1274 = vunpack.c.l.b16 %v1076
  %v1275 = vunpack.c.l.b16 %v1077
  %v1276 = vunpack.c.l.b16 %v1078
  %v1277 = vunpack.c.l.b16 %v1079
  %v1278 = vunpack.c.l.b16 %v1080
  %v1279 = vunpack.c.l.b16 %v1081
  %v1280 = vunpack.c.l.b16 %v1082
  %v1281 = vunpack.c.l.b16 %v1083
  %v1282 = vunpack.c.l.b16 %v1084
  %v1283 = vunpack.c.l.b16 %v1085
  %v1284 = vunpack.c.l.b16 %v1086
  %v1285 = vpack.c.b16 %v1190, %v1189
  %v1286 = vpack.c.b16 %v1192, %v1191
  %v1287 = vpack.c.b16 %v1194, %v1193
  %v1288 = vpack.c.b16 %v1196, %v1195
  %v1289 = vpack.c.b16 %v1198, %v1197
  %v1290 = vpack.c.b16 %v1200, %v1199
  %v1291 = vpack.c.b16 %v1202, %v1201
  %v1292 = vpack.c.b16 %v1204, %v1203
  %v1293 = vpack.c.b16 %v1206, %v1205
  %v1294 = vpack.c.b16 %v1208, %v1207
  %v1295 = vpack.c.b16 %v1210, %v1209
  %v1296 = vpack.c.b16 %v1212, %v1211
  %v1297 = vpack.c.b16 %v1214, %v1213
  %v1298 = vpack.c.b16 %v1216, %v1215
  %v1299 = vpack.c.b16 %v1218, %v1217
  %v1300 = vpack.c.b16 %v1220, %v1219
  %v1301 = vpack.c.b16 %v1222, %v1221
  %v1302 = vpack.c.b16 %v1224, %v1223
  %v1303 = vpack.c.b16 %v1226, %v1225
  %v1304 = vpack.c.b16 %v1228, %v1227
  %v1305 = vpack.c.b16 %v1230, %v1229
  %v1306 = vpack.c.b16 %v1232, %v1231
  %v1307 = vpack.c.b16 %v1234, %v1233
  %v1308 = vpack.c.b16 %v1236, %v1235
  %v1309 = vpack.c.b16 %v1238, %v1237
  %v1310 = vpack.c.b16 %v1240, %v1239
  %v1311 = vpack.c.b16 %v1242, %v1241
  %v1312 = vpack.c.b16 %v1244, %v1243
  %v1313 = vpack.c.b16 %v1246, %v1245
  %v1314 = vpack.c.b16 %v1248, %v1247
  %v1315 = vpack.c.b16 %v1250, %v1249
  %v1316 = vpack.c.b16 %v1252, %v1251
  %v1317 = vpack.c.b16 %v1254, %v1253
  %v1318 = vpack.c.b16 %v1256, %v1255
  %v1319 = vpack.c.b16 %v1258, %v1257
  %v1320 = vpack.c.b16 %v1260, %v1259
  %v1321 = vpack.c.b16 %v1262, %v1261
  %v1322 = vpack.c.b16 %v1264, %v1263
  %v1323 = vpack.c.b16 %v1266, %v1265
  %v1324 = vpack.c.b16 %v1268, %v1267
  %v1325 = vpack.c.b16 %v1270, %v1269
  %v1326 = vpack.c.b16 %v1272, %v1271
  %v1327 = vpack.c.b16 %v1274, %v1273
  %v1328 = vpack.c.b16 %v1276, %v1275
  %v1329 = vpack.c.b16 %v1278, %v1277
  %v1330 = vpack.c.b16 %v1280, %v1279
  %v1331 = vpack.c.b16 %v1282, %v1281
  %v1332 = vpack.c.b16 %v1284, %v1283
  %1381 = vmatprep.subr.bf16.mxu0 0
  %1382 = vmatpush1.bf16.msra.mxu0 %v1285
  %1383 = vmatprep.subr.bf16.mxu0 0
  %1384 = vmatpush1.bf16.msra.mxu0 %v1286
  %1385 = vmatprep.subr.bf16.mxu0 0
  %1386 = vmatpush1.bf16.msra.mxu0 %v1287
  %1387 = vmatprep.subr.bf16.mxu0 0
  %1388 = vmatpush1.bf16.msra.mxu0 %v1288
  %1389 = vmatprep.subr.bf16.mxu0 0
  %1390 = vmatpush1.bf16.msra.mxu0 %v1289
  %1391 = vmatprep.subr.bf16.mxu0 0
  %1392 = vmatpush1.bf16.msra.mxu0 %v1290
  %1393 = vmatprep.subr.bf16.mxu0 0
  %1394 = vmatpush1.bf16.msra.mxu0 %v1291
  %1395 = vmatprep.subr.bf16.mxu0 0
  %1396 = vmatpush1.bf16.msra.mxu0 %v1292
  %1397 = vmatprep.subr.bf16.mxu0 0
  %1398 = vmatpush1.bf16.msra.mxu0 %v1293
  %1399 = vmatprep.subr.bf16.mxu0 0
  %1400 = vmatpush1.bf16.msra.mxu0 %v1294
  %1401 = vmatprep.subr.bf16.mxu0 0
  %1402 = vmatpush1.bf16.msra.mxu0 %v1295
  %1403 = vmatprep.subr.bf16.mxu0 0
  %1404 = vmatpush1.bf16.msra.mxu0 %v1296
  %1405 = vmatprep.subr.bf16.mxu0 0
  %1406 = vmatpush1.bf16.msra.mxu0 %v1297
  %1407 = vmatprep.subr.bf16.mxu0 0
  %1408 = vmatpush1.bf16.msra.mxu0 %v1298
  %1409 = vmatprep.subr.bf16.mxu0 0
  %1410 = vmatpush1.bf16.msra.mxu0 %v1299
  %1411 = vmatprep.subr.bf16.mxu0 0
  %1412 = vmatpush1.bf16.msra.mxu0 %v1300
  %1413 = vmatprep.mubr.bf16.mxu0 %v1088
  %1414 = vmatmul.mubr.bf16.gmra.mrb[0].mxu0 %v1087
  %v1415 = vpop.f32.mrb[0].mxu0
  %v1416 = vadd.f32 0.0, %v1415
  %v1417 = vpop.f32.mrb[0].mxu0
  %v1418 = vpop.f32.mrb[0].mxu0
  %v1419 = vadd.f32 0.0, %v1418
  %v1420 = vpop.f32.mrb[0].mxu0
  %1421 = vdwg.mxu0
  %1422 = vmatprep.subr.bf16.mxu0 0
  %1423 = vmatpush1.bf16.msra.mxu0 %v1301
  %1424 = vmatprep.subr.bf16.mxu0 0
  %1425 = vmatpush1.bf16.msra.mxu0 %v1302
  %1426 = vmatprep.subr.bf16.mxu0 0
  %1427 = vmatpush1.bf16.msra.mxu0 %v1303
  %1428 = vmatprep.subr.bf16.mxu0 0
  %1429 = vmatpush1.bf16.msra.mxu0 %v1304
  %1430 = vmatprep.subr.bf16.mxu0 0
  %1431 = vmatpush1.bf16.msra.mxu0 %v1305
  %1432 = vmatprep.subr.bf16.mxu0 0
  %1433 = vmatpush1.bf16.msra.mxu0 %v1306
  %1434 = vmatprep.subr.bf16.mxu0 0
  %1435 = vmatpush1.bf16.msra.mxu0 %v1307
  %1436 = vmatprep.subr.bf16.mxu0 0
  %1437 = vmatpush1.bf16.msra.mxu0 %v1308
  %1438 = vmatprep.subr.bf16.mxu0 0
  %1439 = vmatpush1.bf16.msra.mxu0 %v1309
  %1440 = vmatprep.subr.bf16.mxu0 0
  %1441 = vmatpush1.bf16.msra.mxu0 %v1310
  %1442 = vmatprep.subr.bf16.mxu0 0
  %1443 = vmatpush1.bf16.msra.mxu0 %v1311
  %1444 = vmatprep.subr.bf16.mxu0 0
  %1445 = vmatpush1.bf16.msra.mxu0 %v1312
  %1446 = vmatprep.subr.bf16.mxu0 0
  %1447 = vmatpush1.bf16.msra.mxu0 %v1313
  %1448 = vmatprep.subr.bf16.mxu0 0
  %1449 = vmatpush1.bf16.msra.mxu0 %v1314
  %1450 = vmatprep.subr.bf16.mxu0 0
  %1451 = vmatpush1.bf16.msra.mxu0 %v1315
  %1452 = vmatprep.subr.bf16.mxu0 0
  %1453 = vmatpush1.bf16.msra.mxu0 %v1316
  %1454 = vmatprep.mubr.bf16.mxu0 %v1090
  %1455 = vmatmul.mubr.bf16.gmra.mrb[0].mxu0 %v1089
  %v1456 = vpop.f32.mrb[0].mxu0
  %v1457 = vadd.f32 %v1416, %v1456
  %v1458 = vpop.f32.mrb[0].mxu0
  %v1459 = vpop.f32.mrb[0].mxu0
  %v1460 = vadd.f32 %v1419, %v1459
  %v1461 = vpop.f32.mrb[0].mxu0
  %1462 = vdwg.mxu0
  %1463 = vmatprep.subr.bf16.mxu0 0
  %1464 = vmatpush1.bf16.msra.mxu0 %v1317
  %1465 = vmatprep.subr.bf16.mxu0 0
  %1466 = vmatpush1.bf16.msra.mxu0 %v1318
  %1467 = vmatprep.subr.bf16.mxu0 0
  %1468 = vmatpush1.bf16.msra.mxu0 %v1319
  %1469 = vmatprep.subr.bf16.mxu0 0
  %1470 = vmatpush1.bf16.msra.mxu0 %v1320
  %1471 = vmatprep.subr.bf16.mxu0 0
  %1472 = vmatpush1.bf16.msra.mxu0 %v1321
  %1473 = vmatprep.subr.bf16.mxu0 0
  %1474 = vmatpush1.bf16.msra.mxu0 %v1322
  %1475 = vmatprep.subr.bf16.mxu0 0
  %1476 = vmatpush1.bf16.msra.mxu0 %v1323
  %1477 = vmatprep.subr.bf16.mxu0 0
  %1478 = vmatpush1.bf16.msra.mxu0 %v1324
  %1479 = vmatprep.subr.bf16.mxu0 0
  %1480 = vmatpush1.bf16.msra.mxu0 %v1325
  %1481 = vmatprep.subr.bf16.mxu0 0
  %1482 = vmatpush1.bf16.msra.mxu0 %v1326
  %1483 = vmatprep.subr.bf16.mxu0 0
  %1484 = vmatpush1.bf16.msra.mxu0 %v1327
  %1485 = vmatprep.subr.bf16.mxu0 0
  %1486 = vmatpush1.bf16.msra.mxu0 %v1328
  %1487 = vmatprep.subr.bf16.mxu0 0
  %1488 = vmatpush1.bf16.msra.mxu0 %v1329
  %1489 = vmatprep.subr.bf16.mxu0 0
  %1490 = vmatpush1.bf16.msra.mxu0 %v1330
  %1491 = vmatprep.subr.bf16.mxu0 0
  %1492 = vmatpush1.bf16.msra.mxu0 %v1331
  %1493 = vmatprep.subr.bf16.mxu0 0
  %1494 = vmatpush1.bf16.msra.mxu0 %v1332
  %1495 = vmatprep.mubr.bf16.mxu0 %v1092
  %1496 = vmatmul.mubr.bf16.gmra.mrb[0].mxu0 %v1091
  %v1497 = vpop.f32.mrb[0].mxu0
  %v1498 = vadd.f32 %v1457, %v1497
  %v1499 = vpop.f32.mrb[0].mxu0
  %v1500 = vpop.f32.mrb[0].mxu0
  %v1501 = vadd.f32 %v1460, %v1500
  %v1502 = vpop.f32.mrb[0].mxu0
  %1503 = vdwg.mxu0
  %v1504 = vmax.f32 %v1498, 0.0
  %v1505 = vmax.f32 %v1501, 0.0
  %v1506 = vld [vmem:[%s18] sm:$0xff]
  %v1507 = vld [vmem:[%s18 + $0x8] sm:$0xff]
  %v1508 = vmul.f32 %v1504, %v1506
  %v1509 = vmul.f32 %v1505, %v1507
  %v1510 = vld [vmem:[%s8] sm:$0xf]
  %v1511 = vld [vmem:[%s8 + $0x4] sm:$0xf]
  %v1512 = vld [vmem:[%s8 + $0x8] sm:$0xf]
  %v1513 = vld [vmem:[%s8 + $0xc] sm:$0xf]
  %v1514 = vld [vmem:[%s8 + $0x10] sm:$0xf]
  %v1515 = vld [vmem:[%s8 + $0x14] sm:$0xf]
  %v1516 = vld [vmem:[%s8 + $0x18] sm:$0xf]
  %v1517 = vld [vmem:[%s8 + $0x1c] sm:$0xf]
  %v1518 = vld [vmem:[%s8 + $0x20] sm:$0xf]
  %v1519 = vld [vmem:[%s8 + $0x24] sm:$0xf]
  %v1520 = vld [vmem:[%s8 + $0x28] sm:$0xf]
  %v1521 = vld [vmem:[%s8 + $0x2c] sm:$0xf]
  %v1522 = vpack.c.bf16 %v1509, %v1508
  %v1535 = vunpack.c.l.b16 %v1510
  %v1536 = vunpack.c.l.b16 %v1511
  %v1537 = vunpack.c.l.b16 %v1512
  %v1538 = vunpack.c.l.b16 %v1513
  %v1539 = vunpack.c.l.b16 %v1514
  %v1540 = vunpack.c.l.b16 %v1515
  %v1541 = vunpack.c.l.b16 %v1516
  %v1542 = vunpack.c.l.b16 %v1517
  %v1543 = vunpack.c.l.b16 %v1518
  %v1544 = vunpack.c.l.b16 %v1519
  %v1545 = vunpack.c.l.b16 %v1520
  %v1546 = vunpack.c.l.b16 %v1521
  %v1547 = vpack.c.b16 %v1536, %v1535
  %v1548 = vpack.c.b16 %v1538, %v1537
  %v1549 = vpack.c.b16 %v1540, %v1539
  %v1550 = vpack.c.b16 %v1542, %v1541
  %v1551 = vpack.c.b16 %v1544, %v1543
  %v1552 = vpack.c.b16 %v1546, %v1545
  %v1560 = vsel %vm691, %v1522, 0
  %1562 = vmatprep.subr.bf16.mxu0 0
  %1563 = vmatpush1.bf16.msra.mxu0 %v1547
  %1564 = vmatprep.subr.bf16.mxu0 0
  %1565 = vmatpush1.bf16.msra.mxu0 %v1548
  %1566 = vmatprep.subr.bf16.mxu0 0
  %1567 = vmatpush1.bf16.msra.mxu0 %v1549
  %1568 = vmatprep.subr.bf16.mxu0 0
  %1569 = vmatpush1.bf16.msra.mxu0 %v1550
  %1570 = vmatprep.subr.bf16.mxu0 0
  %1571 = vmatpush1.bf16.msra.mxu0 %v1551
  %1572 = vmatprep.subr.bf16.mxu0 0
  %1573 = vmatpush1.bf16.msra.mxu0 %v1552
  %1574 = vmatprep.subr.bf16.mxu0 0
  %1575 = vmatpush1.bf16.msra.mxu0 0
  %1576 = vmatprep.subr.bf16.mxu0 0
  %1577 = vmatpush1.bf16.msra.mxu0 0
  %1578 = vmatprep.subr.bf16.mxu0 0
  %1579 = vmatpush1.bf16.msra.mxu0 0
  %1580 = vmatprep.subr.bf16.mxu0 0
  %1581 = vmatpush1.bf16.msra.mxu0 0
  %1582 = vmatprep.subr.bf16.mxu0 0
  %1583 = vmatpush1.bf16.msra.mxu0 0
  %1584 = vmatprep.subr.bf16.mxu0 0
  %1585 = vmatpush1.bf16.msra.mxu0 0
  %1586 = vmatprep.subr.bf16.mxu0 0
  %1587 = vmatpush1.bf16.msra.mxu0 0
  %1588 = vmatprep.subr.bf16.mxu0 0
  %1589 = vmatpush1.bf16.msra.mxu0 0
  %1590 = vmatprep.subr.bf16.mxu0 0
  %1591 = vmatpush1.bf16.msra.mxu0 0
  %1592 = vmatprep.subr.bf16.mxu0 0
  %1593 = vmatpush1.bf16.msra.mxu0 0
  %1594 = vmatprep.mubr.bf16.mxu0 0
  %1595 = vmatmul.mubr.bf16.gmra.mrb[0].mxu0 %v1560
  %v1596 = vpop.f32.mrb[0].mxu0
  %v1597 = vadd.f32 0.0, %v1596
  %v1598 = vpop.f32.mrb[0].mxu0
  %v1599 = vpop.f32.mrb[0].mxu0
  %v1600 = vadd.f32 0.0, %v1599
  %v1601 = vpop.f32.mrb[0].mxu0
  %1602 = vdwg.mxu0
  %v1603 = vmax.f32 %v1597, 0.0
  %v1604 = vmax.f32 %v1600, 0.0
  %v1605 = vld [vmem:[%s19] sm:$0xff]
  %v1606 = vld [vmem:[%s19 + $0x8] sm:$0xff]
  %v1607 = vmul.f32 %v1603, %v1605
  %v1608 = vmul.f32 %v1604, %v1606
  %v1609 = vld [vmem:[%s9] sm:$0xf]
  %v1610 = vld [vmem:[%s9 + $0x4] sm:$0xf]
  %v1611 = vld [vmem:[%s9 + $0x8] sm:$0xf]
  %v1612 = vld [vmem:[%s9 + $0xc] sm:$0xf]
  %v1613 = vld [vmem:[%s9 + $0x10] sm:$0xf]
  %v1614 = vld [vmem:[%s9 + $0x14] sm:$0xf]
  %v1615 = vpack.c.bf16 %v1608, %v1607
  %v1622 = vunpack.c.l.b16 %v1609
  %v1623 = vunpack.c.l.b16 %v1610
  %v1624 = vunpack.c.l.b16 %v1611
  %v1625 = vunpack.c.l.b16 %v1612
  %v1626 = vunpack.c.l.b16 %v1613
  %v1627 = vunpack.c.l.b16 %v1614
  %v1628 = vpack.c.b16 %v1623, %v1622
  %v1629 = vpack.c.b16 %v1625, %v1624
  %v1630 = vpack.c.b16 %v1627, %v1626
  %v1635 = vsel %vm767, %v1615, 0
  %1637 = vmatprep.subr.bf16.mxu0 0
  %1638 = vmatpush1.bf16.msra.mxu0 %v1628
  %1639 = vmatprep.subr.bf16.mxu0 0
  %1640 = vmatpush1.bf16.msra.mxu0 %v1629
  %1641 = vmatprep.subr.bf16.mxu0 0
  %1642 = vmatpush1.bf16.msra.mxu0 %v1630
  %1643 = vmatprep.subr.bf16.mxu0 0
  %1644 = vmatpush1.bf16.msra.mxu0 0
  %1645 = vmatprep.subr.bf16.mxu0 0
  %1646 = vmatpush1.bf16.msra.mxu0 0
  %1647 = vmatprep.subr.bf16.mxu0 0
  %1648 = vmatpush1.bf16.msra.mxu0 0
  %1649 = vmatprep.subr.bf16.mxu0 0
  %1650 = vmatpush1.bf16.msra.mxu0 0
  %1651 = vmatprep.subr.bf16.mxu0 0
  %1652 = vmatpush1.bf16.msra.mxu0 0
  %1653 = vmatprep.subr.bf16.mxu0 0
  %1654 = vmatpush1.bf16.msra.mxu0 0
  %1655 = vmatprep.subr.bf16.mxu0 0
  %1656 = vmatpush1.bf16.msra.mxu0 0
  %1657 = vmatprep.subr.bf16.mxu0 0
  %1658 = vmatpush1.bf16.msra.mxu0 0
  %1659 = vmatprep.subr.bf16.mxu0 0
  %1660 = vmatpush1.bf16.msra.mxu0 0
  %1661 = vmatprep.subr.bf16.mxu0 0
  %1662 = vmatpush1.bf16.msra.mxu0 0
  %1663 = vmatprep.subr.bf16.mxu0 0
  %1664 = vmatpush1.bf16.msra.mxu0 0
  %1665 = vmatprep.subr.bf16.mxu0 0
  %1666 = vmatpush1.bf16.msra.mxu0 0
  %1667 = vmatprep.subr.bf16.mxu0 0
  %1668 = vmatpush1.bf16.msra.mxu0 0
  %1669 = vmatprep.mubr.bf16.mxu0 0
  %1670 = vmatmul.mubr.bf16.gmra.mrb[0].mxu0 %v1635
  %v1671 = vpop.f32.mrb[0].mxu0
  %v1672 = vadd.f32 0.0, %v1671
  %v1673 = vpop.f32.mrb[0].mxu0
  %v1674 = vpop.f32.mrb[0].mxu0
  %v1675 = vadd.f32 0.0, %v1674
  %v1676 = vpop.f32.mrb[0].mxu0
  %1677 = vdwg.mxu0
  %v1678 = vmax.f32 %v1672, 0.0
  %v1679 = vmax.f32 %v1675, 0.0
  %v1680 = vld [vmem:[%s20] sm:$0xff]
  %v1681 = vld [vmem:[%s20 + $0x8] sm:$0xff]
  %v1682 = vmul.f32 %v1678, %v1680
  %v1683 = vmul.f32 %v1679, %v1681
  %v1684 = vld [vmem:[%s10] sm:$0xf]
  %v1685 = vld [vmem:[%s10 + $0x4] sm:$0xf]
  %v1686 = vld [vmem:[%s10 + $0x8] sm:$0xf]
  %v1687 = vpack.c.bf16 %v1683, %v1682
  %v1691 = vunpack.c.l.b16 %v1684
  %v1692 = vunpack.c.l.b16 %v1685
  %v1693 = vunpack.c.l.b16 %v1686
  %v1694 = vpack.c.b16 %v1692, %v1691
  %v1695 = vpack.c.b16 %v1693, %v1693
  %v1698 = vsel %vm831, %v1687, 0
  %v1701 = vsel %vm835, %v1695, 0
  %1703 = vmatprep.subr.bf16.mxu0 0
  %1704 = vmatpush1.bf16.msra.mxu0 %v1694
  %1705 = vmatprep.subr.bf16.mxu0 0
  %1706 = vmatpush1.bf16.msra.mxu0 %v1701
  %1707 = vmatprep.subr.bf16.mxu0 0
  %1708 = vmatpush1.bf16.msra.mxu0 0
  %1709 = vmatprep.subr.bf16.mxu0 0
  %1710 = vmatpush1.bf16.msra.mxu0 0
  %1711 = vmatprep.subr.bf16.mxu0 0
  %1712 = vmatpush1.bf16.msra.mxu0 0
  %1713 = vmatprep.subr.bf16.mxu0 0
  %1714 = vmatpush1.bf16.msra.mxu0 0
  %1715 = vmatprep.subr.bf16.mxu0 0
  %1716 = vmatpush1.bf16.msra.mxu0 0
  %1717 = vmatprep.subr.bf16.mxu0 0
  %1718 = vmatpush1.bf16.msra.mxu0 0
  %1719 = vmatprep.subr.bf16.mxu0 0
  %1720 = vmatpush1.bf16.msra.mxu0 0
  %1721 = vmatprep.subr.bf16.mxu0 0
  %1722 = vmatpush1.bf16.msra.mxu0 0
  %1723 = vmatprep.subr.bf16.mxu0 0
  %1724 = vmatpush1.bf16.msra.mxu0 0
  %1725 = vmatprep.subr.bf16.mxu0 0
  %1726 = vmatpush1.bf16.msra.mxu0 0
  %1727 = vmatprep.subr.bf16.mxu0 0
  %1728 = vmatpush1.bf16.msra.mxu0 0
  %1729 = vmatprep.subr.bf16.mxu0 0
  %1730 = vmatpush1.bf16.msra.mxu0 0
  %1731 = vmatprep.subr.bf16.mxu0 0
  %1732 = vmatpush1.bf16.msra.mxu0 0
  %1733 = vmatprep.subr.bf16.mxu0 0
  %1734 = vmatpush1.bf16.msra.mxu0 0
  %1735 = vmatprep.mubr.bf16.mxu0 0
  %1736 = vmatmul.mubr.bf16.gmra.mrb[0].mxu0 %v1698
  %v1737 = vpop.f32.mrb[0].mxu0
  %v1738 = vadd.f32 0.0, %v1737
  %v1739 = vpop.f32.mrb[0].mxu0
  %v1740 = vpop.f32.mrb[0].mxu0
  %v1741 = vadd.f32 0.0, %v1740
  %v1742 = vpop.f32.mrb[0].mxu0
  %1743 = vdwg.mxu0
  %v1744 = vmax.f32 %v1738, 0.0
  %v1745 = vmax.f32 %v1741, 0.0
  %v1746 = vld [vmem:[%s21] sm:$0xff]
  %v1747 = vld [vmem:[%s21 + $0x8] sm:$0xff]
  %v1748 = vmul.f32 %v1744, %v1746
  %v1749 = vmul.f32 %v1745, %v1747
  %v1750 = vld [vmem:[%s11] sm:$0xf]
  %v1751 = vld [vmem:[%s11 + $0x4] sm:$0x3]
  %v1752 = vpack.c.bf16 %v1749, %v1748
  %v1755 = vunpack.c.l.b16 %v1750
  %v1756 = vunpack.c.l.b16 %v1751
  %v1757 = vpack.c.b16 %v1756, %v1755
  %v1759 = vsel %vm894, %v1752, 0
  %v1762 = vsel %vm898, %v1757, 0
  %1764 = vmatprep.subr.bf16.mxu0 0
  %1765 = vmatpush1.bf16.msra.mxu0 %v1762
  %1766 = vmatprep.subr.bf16.mxu0 0
  %1767 = vmatpush1.bf16.msra.mxu0 0
  %1768 = vmatprep.subr.bf16.mxu0 0
  %1769 = vmatpush1.bf16.msra.mxu0 0
  %1770 = vmatprep.subr.bf16.mxu0 0
  %1771 = vmatpush1.bf16.msra.mxu0 0
  %1772 = vmatprep.subr.bf16.mxu0 0
  %1773 = vmatpush1.bf16.msra.mxu0 0
  %1774 = vmatprep.subr.bf16.mxu0 0
  %1775 = vmatpush1.bf16.msra.mxu0 0
  %1776 = vmatprep.subr.bf16.mxu0 0
  %1777 = vmatpush1.bf16.msra.mxu0 0
  %1778 = vmatprep.subr.bf16.mxu0 0
  %1779 = vmatpush1.bf16.msra.mxu0 0
  %1780 = vmatprep.subr.bf16.mxu0 0
  %1781 = vmatpush1.bf16.msra.mxu0 0
  %1782 = vmatprep.subr.bf16.mxu0 0
  %1783 = vmatpush1.bf16.msra.mxu0 0
  %1784 = vmatprep.subr.bf16.mxu0 0
  %1785 = vmatpush1.bf16.msra.mxu0 0
  %1786 = vmatprep.subr.bf16.mxu0 0
  %1787 = vmatpush1.bf16.msra.mxu0 0
  %1788 = vmatprep.subr.bf16.mxu0 0
  %1789 = vmatpush1.bf16.msra.mxu0 0
  %1790 = vmatprep.subr.bf16.mxu0 0
  %1791 = vmatpush1.bf16.msra.mxu0 0
  %1792 = vmatprep.subr.bf16.mxu0 0
  %1793 = vmatpush1.bf16.msra.mxu0 0
  %1794 = vmatprep.subr.bf16.mxu0 0
  %1795 = vmatpush1.bf16.msra.mxu0 0
  %1796 = vmatprep.mubr.bf16.mxu0 0
  %1797 = vmatmul.mubr.bf16.gmra.mrb[0].mxu0 %v1759
  %v1798 = vpop.f32.mrb[0].mxu0
  %v1799 = vadd.f32 0.0, %v1798
  %v1800 = vpop.f32.mrb[0].mxu0
  %v1801 = vpop.f32.mrb[0].mxu0
  %v1802 = vadd.f32 0.0, %v1801
  %v1803 = vpop.f32.mrb[0].mxu0
  %1804 = vdwg.mxu0
  %vm1805 = vcmask 64512
  %v1806 = vsel %vm1805, %v937, 0.0
  %1807 = vadd.xlane.f32.xlu0 %v1806
  %v1808 = vpop.xlane.xlu0 %1807
  %v1809 = vsel %vm1805, %v940, 0.0
  %1810 = vadd.xlane.f32.xlu0 %v1809
  %v1811 = vpop.xlane.xlu0 %1810
  %v1812 = vld [vmem:[%s22] sm:$0xff]
  %v1813 = vld [vmem:[%s22 + $0x8] sm:$0xff]
  %v1814 = vmul.f32 %v1808, %v1812
  %v1815 = vmul.f32 %v1811, %v1813
  %1817 = vset.pattern.permute.xlu0 0
  %1818 = vperm.xlu0 %1817, %v1814
  %v1819 = vpop.permute.xlu0 %1818
  %1822 = vset.pattern.permute.xlu0 0
  %1823 = vperm.xlu0 %1822, %v1815
  %v1824 = vpop.permute.xlu0 %1823
  %v1826 = vmul.f32 %v1799, %v1819
  %v1827 = vmul.f32 %v1802, %v1824
  %v1828 = vadd.f32 %v1826, %v1827
  %1829 = vst [vmem:[%s23] sm:$0xff] %v1828
  // Predicated region
  $region94: #{net_forward.3} parent=0 // pred_check
    _
  $region95: #{net_forward.3} parent=0 // pred_check_branch
    %1831 = sbr.rel (0) target = $region97
  $region96: #{net_forward.3} parent=0 // pred_region
    _
  $region97: #{net_forward.3} parent=0 // pred_fallthru
    _
  // Predicated region
  $region98: #{net_forward.3} parent=0 // pred_check
    _
  $region99: #{net_forward.3} parent=0 // pred_check_branch
    %1833 = sbr.rel (0) target = $region101
  $region100: #{net_forward.3} parent=0 // pred_region
    _
  $region101: #{net_forward.3} parent=0 // pred_fallthru
    _

</llo_original>
